<compile_context>
chip_gen: v7x
topology: tpu7x:2x2x1
jax: 0.10.0
libtpu: 0.0.40
codegen_flags: <defaults>
</compile_context>

<pallas_src>
import jax
import jax.numpy as jnp
import numpy as np
from jax.experimental import pallas as pl
from jax.experimental.pallas import tpu as pltpu


# ----------------------------------------------------------------------------
# Config (small, deterministic)
# ----------------------------------------------------------------------------
BATCH = 16
SEQ = 16
HIDDEN = 32
VOCAB = 64
NUM_FILTERS = 8
FILTER_SIZES = (2, 3, 4)
NUM_CLASSES = 4

K_MAX = max(FILTER_SIZES)                   # 4
BS = BATCH * SEQ                            # 256 flattened rows
TILE_B = 8                                  # batches per grid step
ROWS = TILE_B * SEQ                         # 128 rows per tile -> full MXU M
TOTAL_F = NUM_FILTERS * len(FILTER_SIZES)   # 24 real conv features
NF_PAD = 128                                # lane-dense conv-feature width
C_PAD = 128                                 # lane-dense class width

assert K_MAX <= SEQ, "roll+mask scheme requires filter_size <= seq_len"
assert BATCH % TILE_B == 0
assert K_MAX * HIDDEN == 128, "fused conv matmul K dim expected to be 128"


# ----------------------------------------------------------------------------
# Fused kernel: embed -> dense+tanh+mask -> fused conv -> relu -> maxpool -> fc
# ----------------------------------------------------------------------------
def bert_cnn_kernel(ids_ref, mask_ref, emb_ref, wenc_ref, benc_ref,
                    wconv_ref, bconv_ref, wfc_ref, bfc_ref, o_ref):
    # ---- in-kernel embedding lookup as a one-hot MXU matmul ------------------
    ids = ids_ref[...]                                            # (ROWS,1) i32
    vocab_iota = jax.lax.broadcasted_iota(jnp.int32, (ROWS, VOCAB), 1)
    onehot = jnp.where(vocab_iota == ids, 1.0, 0.0)               # (ROWS,VOCAB)
    emb = jnp.dot(onehot, emb_ref[...],
                  preferred_element_type=jnp.float32)             # (ROWS,H)

    # ---- BERT stand-in: dense + tanh, attention-masked -----------------------
    enc = jnp.tanh(
        jnp.dot(emb, wenc_ref[...], preferred_element_type=jnp.float32)
        + benc_ref[...])                                          # (ROWS,H)
    enc = enc * mask_ref[...].astype(jnp.float32)                 # (ROWS,1) bcast

    # ---- all conv branches as ONE (ROWS,128)@(128,128) matmul ----------------
    # LHS row p = [enc[p], enc[p+1], ..., enc[p+K_MAX-1]] (wrapping); shifts via
    # XLU roll (no concat-with-zeros, no unaligned sublane slices).  Wrapped /
    # cross-batch windows are zeroed post-ReLU; offsets j >= k of each filter
    # group are zero columns in the pre-fused weight.
    parts = [enc]
    for j in range(1, K_MAX):
        parts.append(pltpu.roll(enc, shift=ROWS - j, axis=0))     # == shift by -j
    lhs = jnp.concatenate(parts, axis=1)                          # (ROWS, K_MAX*H)

    wconv = wconv_ref[...].astype(jnp.float32)                    # bf16 -> f32
    scores = jnp.dot(lhs, wconv, preferred_element_type=jnp.float32) \
        + bconv_ref[...]                                          # (ROWS, NF_PAD)
    scores = jnp.maximum(scores, 0.0)                             # ReLU (>= 0!)

    # ---- zero invalid / wrapped windows (valid ONLY because scores >= 0) -----
    pos = jax.lax.broadcasted_iota(jnp.int32, (ROWS, NF_PAD), 0) % SEQ
    lane = jax.lax.broadcasted_iota(jnp.int32, (ROWS, NF_PAD), 1)
    valid = jnp.zeros((ROWS, NF_PAD), dtype=jnp.bool_)
    for g, k in enumerate(FILTER_SIZES):
        in_grp = jnp.logical_and(lane >= g * NUM_FILTERS,
                                 lane < (g + 1) * NUM_FILTERS)
        valid = jnp.logical_or(valid,
                               jnp.logical_and(in_grp, pos < SEQ - k + 1))
    scores = jnp.where(valid, scores, 0.0)

    # ---- max-pool over time per batch row (single cross-sublane reduce) ------
    feats = jnp.max(scores.reshape(TILE_B, SEQ, NF_PAD), axis=1)  # (TILE_B, NF_PAD)

    # ---- classifier (dropout = identity at inference), lane-dense store ------
    wfc = wfc_ref[...].astype(jnp.float32)                        # bf16 -> f32
    o_ref[...] = (jnp.dot(feats, wfc, preferred_element_type=jnp.float32)
                  + bfc_ref[...])                                 # (TILE_B, C_PAD)


# ----------------------------------------------------------------------------
# Params: base weights + one-time fused / padded host-side layouts
# ----------------------------------------------------------------------------
def init_params(key):
    ks = jax.random.split(key, 5 + 2 * len(FILTER_SIZES))
    emb_table = 0.02 * jax.random.normal(ks[0], (VOCAB, HIDDEN), jnp.float32)
    w_enc = 0.05 * jax.random.normal(ks[1], (HIDDEN, HIDDEN), jnp.float32)
    b_enc = 0.01 * jax.random.normal(ks[2], (1, HIDDEN), jnp.float32)
    w_fc = 0.05 * jax.random.normal(ks[3], (NUM_CLASSES, TOTAL_F), jnp.float32)
    b_fc = 0.01 * jax.random.normal(ks[4], (1, NUM_CLASSES), jnp.float32)

    # Per-filter-size conv weights (PyTorch Conv2d(1, NF, (k, H)), channel squeezed).
    conv_ws, conv_bs = [], []
    for i, k in enumerate(FILTER_SIZES):
        conv_ws.append(0.1 * jax.random.normal(
            ks[5 + 2 * i], (NUM_FILTERS, k, HIDDEN), jnp.float32))
        conv_bs.append(0.01 * jax.random.normal(
            ks[6 + 2 * i], (1, NUM_FILTERS), jnp.float32))

    # One-time host fusion: all filter sizes / offsets -> one (K_MAX*H, NF_PAD)
    # weight so the whole conv is a single K=128 matmul in-kernel.
    w_conv = np.zeros((K_MAX * HIDDEN, NF_PAD), np.float32)
    b_conv = np.zeros((1, NF_PAD), np.float32)
    for g, k in enumerate(FILTER_SIZES):
        col = g * NUM_FILTERS
        wg = np.asarray(conv_ws[g])                      # (NF, k, H)
        for j in range(k):                               # offsets j >= k stay 0
            w_conv[j * HIDDEN:(j + 1) * HIDDEN, col:col + NUM_FILTERS] = wg[:, j, :].T
        b_conv[0, col:col + NUM_FILTERS] = np.asarray(conv_bs[g])[0]

    # FC weight pre-transposed + lane-padded once (no per-call .T).
    w_fc_pad = np.zeros((NF_PAD, C_PAD), np.float32)
    w_fc_pad[:TOTAL_F, :NUM_CLASSES] = np.asarray(w_fc).T
    b_fc_pad = np.zeros((1, C_PAD), np.float32)
    b_fc_pad[0, :NUM_CLASSES] = np.asarray(b_fc)[0]

    return {
        "emb_table": emb_table,
        "w_enc": w_enc, "b_enc": b_enc,
        # big constant weights stored bf16 to halve per-call HBM->VMEM bytes
        "w_conv": jnp.asarray(w_conv, dtype=jnp.bfloat16),
        "b_conv": jnp.asarray(b_conv),
        "w_fc_pad": jnp.asarray(w_fc_pad, dtype=jnp.bfloat16),
        "b_fc_pad": jnp.asarray(b_fc_pad),
    }


# ----------------------------------------------------------------------------
# Forward: one fused pallas_call over batch tiles + final class slice
# ----------------------------------------------------------------------------
@jax.jit
def bert_cnn_forward(params, context, mask):
    ids = context.reshape(BS, 1).astype(jnp.int32)       # bitcast-reshape
    msk = mask.reshape(BS, 1).astype(jnp.int32)

    logits_pad = pl.pallas_call(
        bert_cnn_kernel,
        out_shape=jax.ShapeDtypeStruct((BATCH, C_PAD), jnp.float32),
        grid_spec=pltpu.PrefetchScalarGridSpec(
            num_scalar_prefetch=0,
            grid=(BATCH // TILE_B,),
            in_specs=[
                pl.BlockSpec((ROWS, 1), lambda i: (i, 0)),               # token ids
                pl.BlockSpec((ROWS, 1), lambda i: (i, 0)),               # attention mask
                pl.BlockSpec((VOCAB, HIDDEN), lambda i: (0, 0)),         # emb table
                pl.BlockSpec((HIDDEN, HIDDEN), lambda i: (0, 0)),        # w_enc
                pl.BlockSpec((1, HIDDEN), lambda i: (0, 0)),             # b_enc
                pl.BlockSpec((K_MAX * HIDDEN, NF_PAD), lambda i: (0, 0)),  # fused conv w
                pl.BlockSpec((1, NF_PAD), lambda i: (0, 0)),             # fused conv b
                pl.BlockSpec((NF_PAD, C_PAD), lambda i: (0, 0)),         # fc w (pre-T, pad)
                pl.BlockSpec((1, C_PAD), lambda i: (0, 0)),              # fc b (pad)
            ],
            out_specs=pl.BlockSpec((TILE_B, C_PAD), lambda i: (i, 0)),
        ),
        compiler_params=pltpu.CompilerParams(
            dimension_semantics=("parallel",)),   # v7x: shard batch tiles over 2 TCs
    )(ids, msk, params["emb_table"], params["w_enc"], params["b_enc"],
      params["w_conv"], params["b_conv"], params["w_fc_pad"], params["b_fc_pad"])

    return logits_pad[:, :NUM_CLASSES]                   # [B, C]


if __name__ == "__main__":
    key = jax.random.PRNGKey(0)
    k_par, k_tok = jax.random.split(key, 2)

    params = init_params(k_par)
    context = jax.random.randint(k_tok, (BATCH, SEQ), 0, VOCAB, dtype=jnp.int32)
    # attention mask: first `length` positions valid, tail padded (deterministic)
    lengths = (SEQ - (jnp.arange(BATCH) % 5)).astype(jnp.int32)
    mask = (jnp.arange(SEQ)[None, :] < lengths[:, None]).astype(jnp.int32)

    out = bert_cnn_forward(params, context, mask)
    jax.block_until_ready(out)
    assert out.shape == (BATCH, NUM_CLASSES) and out.dtype == jnp.float32
    print("KERNEL_OK")
</pallas_src>

<mosaic_0001>
module attributes {stable_mosaic.version = 11 : i64} {
  func.func @bert_cnn_kernel(%arg0: i32, %arg1: memref<128x1xi32, #tpu.memory_space<vmem>>, %arg2: memref<128x1xi32, #tpu.memory_space<vmem>>, %arg3: memref<64x32xf32, #tpu.memory_space<vmem>>, %arg4: memref<32x32xf32, #tpu.memory_space<vmem>>, %arg5: memref<1x32xf32, #tpu.memory_space<vmem>>, %arg6: memref<128x128xbf16, #tpu.memory_space<vmem>>, %arg7: memref<1x128xf32, #tpu.memory_space<vmem>>, %arg8: memref<128x128xbf16, #tpu.memory_space<vmem>>, %arg9: memref<1x128xf32, #tpu.memory_space<vmem>>, %arg10: memref<8x128xf32, #tpu.memory_space<vmem>>) attributes {dimension_semantics = [#tpu.dimension_semantics<parallel>], iteration_bounds = array<i64: 2>, scalar_prefetch = 0 : i64, scratch_operands = 0 : i64, tpu.core_type = #tpu.core_type<tc>, window_params = [{transform_indices = @transform_0, window_bounds = array<i64: 128, 1>}, {transform_indices = @transform_1, window_bounds = array<i64: 128, 1>}, {pipeline_mode = #tpu.pipeline_mode<synchronous>, transform_indices = @transform_2, window_bounds = array<i64: 64, 32>}, {pipeline_mode = #tpu.pipeline_mode<synchronous>, transform_indices = @transform_3, window_bounds = array<i64: 32, 32>}, {pipeline_mode = #tpu.pipeline_mode<synchronous>, transform_indices = @transform_4, window_bounds = array<i64: 1, 32>}, {pipeline_mode = #tpu.pipeline_mode<synchronous>, transform_indices = @transform_5, window_bounds = array<i64: 128, 128>}, {pipeline_mode = #tpu.pipeline_mode<synchronous>, transform_indices = @transform_6, window_bounds = array<i64: 1, 128>}, {pipeline_mode = #tpu.pipeline_mode<synchronous>, transform_indices = @transform_7, window_bounds = array<i64: 128, 128>}, {pipeline_mode = #tpu.pipeline_mode<synchronous>, transform_indices = @transform_8, window_bounds = array<i64: 1, 128>}, {transform_indices = @transform_9, window_bounds = array<i64: 8, 128>}]} {
    %c0 = arith.constant 0 : index
    %c0_0 = arith.constant 0 : index
    %0 = vector.load %arg1[%c0, %c0_0] : memref<128x1xi32, #tpu.memory_space<vmem>>, vector<128x1xi32>
    %1 = tpu.iota {dimensions = array<i32: 1>} : vector<128x64xi32>
    %2 = vector.broadcast %0 : vector<128x1xi32> to vector<128x64xi32>
    %3 = arith.cmpi eq, %1, %2 : vector<128x64xi32>
    %cst = arith.constant 1.000000e+00 : f32
    %cst_1 = arith.constant 0.000000e+00 : f32
    %4 = vector.broadcast %cst : f32 to vector<128x64xf32>
    %5 = vector.broadcast %cst_1 : f32 to vector<128x64xf32>
    %6 = arith.select %3, %4, %5 : vector<128x64xi1>, vector<128x64xf32>
    %c0_2 = arith.constant 0 : index
    %c0_3 = arith.constant 0 : index
    %7 = vector.load %arg3[%c0_2, %c0_3] : memref<64x32xf32, #tpu.memory_space<vmem>>, vector<64x32xf32>
    %cst_4 = arith.constant dense<0.000000e+00> : vector<128x32xf32>
    %8 = tpu.matmul %6, %7, %cst_4 {dimension_numbers = #tpu.dot_dimension_numbers<[1], [0], [0], [1], [0, 0, 1, 1], [], []>} : vector<128x64xf32>, vector<64x32xf32>, vector<128x32xf32> -> vector<128x32xf32>
    %c0_5 = arith.constant 0 : index
    %c0_6 = arith.constant 0 : index
    %9 = vector.load %arg4[%c0_5, %c0_6] : memref<32x32xf32, #tpu.memory_space<vmem>>, vector<32x32xf32>
    %cst_7 = arith.constant dense<0.000000e+00> : vector<128x32xf32>
    %10 = tpu.matmul %8, %9, %cst_7 {dimension_numbers = #tpu.dot_dimension_numbers<[1], [0], [0], [1], [0, 0, 1, 1], [], []>} : vector<128x32xf32>, vector<32x32xf32>, vector<128x32xf32> -> vector<128x32xf32>
    %c0_8 = arith.constant 0 : index
    %c0_9 = arith.constant 0 : index
    %11 = vector.load %arg5[%c0_8, %c0_9] : memref<1x32xf32, #tpu.memory_space<vmem>>, vector<1x32xf32>
    %12 = vector.broadcast %11 : vector<1x32xf32> to vector<128x32xf32>
    %13 = arith.addf %10, %12 : vector<128x32xf32>
    %14 = math.tanh %13 : vector<128x32xf32>
    %c0_10 = arith.constant 0 : index
    %c0_11 = arith.constant 0 : index
    %15 = vector.load %arg2[%c0_10, %c0_11] : memref<128x1xi32, #tpu.memory_space<vmem>>, vector<128x1xi32>
    %16 = arith.sitofp %15 : vector<128x1xi32> to vector<128x1xf32>
    %17 = vector.broadcast %16 : vector<128x1xf32> to vector<128x32xf32>
    %18 = arith.mulf %14, %17 : vector<128x32xf32>
    %c127_i32 = arith.constant 127 : i32
    %19 = tpu.dynamic_rotate %18 by %c127_i32 dim 0 : vector<128x32xf32>, i32 -> vector<128x32xf32>
    %c126_i32 = arith.constant 126 : i32
    %20 = tpu.dynamic_rotate %18 by %c126_i32 dim 0 : vector<128x32xf32>, i32 -> vector<128x32xf32>
    %c125_i32 = arith.constant 125 : i32
    %21 = tpu.dynamic_rotate %18 by %c125_i32 dim 0 : vector<128x32xf32>, i32 -> vector<128x32xf32>
    %22 = tpu.concatenate %18, %19, %20, %21 in 1 : vector<128x32xf32>, vector<128x32xf32>, vector<128x32xf32>, vector<128x32xf32> -> vector<128x128xf32>
    %c0_12 = arith.constant 0 : index
    %c0_13 = arith.constant 0 : index
    %23 = vector.load %arg6[%c0_12, %c0_13] : memref<128x128xbf16, #tpu.memory_space<vmem>>, vector<128x128xbf16>
    %24 = arith.extf %23 : vector<128x128xbf16> to vector<128x128xf32>
    %cst_14 = arith.constant dense<0.000000e+00> : vector<128x128xf32>
    %25 = tpu.matmul %22, %24, %cst_14 {dimension_numbers = #tpu.dot_dimension_numbers<[1], [0], [0], [1], [0, 0, 1, 1], [], []>} : vector<128x128xf32>, vector<128x128xf32>, vector<128x128xf32> -> vector<128x128xf32>
    %c0_15 = arith.constant 0 : index
    %c0_16 = arith.constant 0 : index
    %26 = vector.load %arg7[%c0_15, %c0_16] : memref<1x128xf32, #tpu.memory_space<vmem>>, vector<1x128xf32>
    %27 = vector.broadcast %26 : vector<1x128xf32> to vector<128x128xf32>
    %28 = arith.addf %25, %27 : vector<128x128xf32>
    %cst_17 = arith.constant 0.000000e+00 : f32
    %29 = vector.broadcast %cst_17 : f32 to vector<128x128xf32>
    %30 = arith.maximumf %28, %29 : vector<128x128xf32>
    %31 = tpu.iota {dimensions = array<i32: 0>} : vector<128x128xi32>
    %c16_i32 = arith.constant 16 : i32
    %c0_i32 = arith.constant 0 : i32
    %32 = arith.cmpi eq, %c16_i32, %c0_i32 : i32
    %c1_i32 = arith.constant 1 : i32
    %33 = arith.select %32, %c1_i32, %c16_i32 : i32
    %34 = vector.broadcast %33 : i32 to vector<128x128xi32>
    %35 = arith.remsi %31, %34 : vector<128x128xi32>
    %c0_i32_18 = arith.constant 0 : i32
    %36 = vector.broadcast %c0_i32_18 : i32 to vector<128x128xi32>
    %37 = arith.cmpi ne, %35, %36 : vector<128x128xi32>
    %c0_i32_19 = arith.constant 0 : i32
    %38 = vector.broadcast %c0_i32_19 : i32 to vector<128x128xi32>
    %39 = arith.cmpi slt, %35, %38 : vector<128x128xi32>
    %c0_i32_20 = arith.constant 0 : i32
    %40 = arith.cmpi slt, %33, %c0_i32_20 : i32
    %41 = vector.broadcast %40 : i1 to vector<128x128xi1>
    %42 = vector.broadcast %41 : vector<128x128xi1> to vector<128x128xi1>
    %43 = arith.xori %39, %42 : vector<128x128xi1>
    %44 = arith.andi %43, %37 : vector<128x128xi1>
    %45 = vector.broadcast %33 : i32 to vector<128x128xi32>
    %46 = arith.addi %35, %45 : vector<128x128xi32>
    %47 = arith.select %44, %46, %35 : vector<128x128xi1>, vector<128x128xi32>
    %48 = tpu.iota {dimensions = array<i32: 1>} : vector<128x128xi32>
    %false = arith.constant false
    %49 = vector.broadcast %false : i1 to vector<128x128xi1>
    %c0_i32_21 = arith.constant 0 : i32
    %50 = vector.broadcast %c0_i32_21 : i32 to vector<128x128xi32>
    %51 = arith.cmpi sge, %48, %50 : vector<128x128xi32>
    %c8_i32 = arith.constant 8 : i32
    %52 = vector.broadcast %c8_i32 : i32 to vector<128x128xi32>
    %53 = arith.cmpi slt, %48, %52 : vector<128x128xi32>
    %54 = arith.andi %51, %53 : vector<128x128xi1>
    %c15_i32 = arith.constant 15 : i32
    %55 = vector.broadcast %c15_i32 : i32 to vector<128x128xi32>
    %56 = arith.cmpi slt, %47, %55 : vector<128x128xi32>
    %57 = arith.andi %54, %56 : vector<128x128xi1>
    %58 = arith.ori %49, %57 : vector<128x128xi1>
    %c8_i32_22 = arith.constant 8 : i32
    %59 = vector.broadcast %c8_i32_22 : i32 to vector<128x128xi32>
    %60 = arith.cmpi sge, %48, %59 : vector<128x128xi32>
    %c16_i32_23 = arith.constant 16 : i32
    %61 = vector.broadcast %c16_i32_23 : i32 to vector<128x128xi32>
    %62 = arith.cmpi slt, %48, %61 : vector<128x128xi32>
    %63 = arith.andi %60, %62 : vector<128x128xi1>
    %c14_i32 = arith.constant 14 : i32
    %64 = vector.broadcast %c14_i32 : i32 to vector<128x128xi32>
    %65 = arith.cmpi slt, %47, %64 : vector<128x128xi32>
    %66 = arith.andi %63, %65 : vector<128x128xi1>
    %67 = arith.ori %58, %66 : vector<128x128xi1>
    %c16_i32_24 = arith.constant 16 : i32
    %68 = vector.broadcast %c16_i32_24 : i32 to vector<128x128xi32>
    %69 = arith.cmpi sge, %48, %68 : vector<128x128xi32>
    %c24_i32 = arith.constant 24 : i32
    %70 = vector.broadcast %c24_i32 : i32 to vector<128x128xi32>
    %71 = arith.cmpi slt, %48, %70 : vector<128x128xi32>
    %72 = arith.andi %69, %71 : vector<128x128xi1>
    %c13_i32 = arith.constant 13 : i32
    %73 = vector.broadcast %c13_i32 : i32 to vector<128x128xi32>
    %74 = arith.cmpi slt, %47, %73 : vector<128x128xi32>
    %75 = arith.andi %72, %74 : vector<128x128xi1>
    %76 = arith.ori %67, %75 : vector<128x128xi1>
    %cst_25 = arith.constant 0.000000e+00 : f32
    %77 = vector.broadcast %cst_25 : f32 to vector<128x128xf32>
    %78 = arith.select %76, %30, %77 : vector<128x128xi1>, vector<128x128xf32>
    %79 = vector.shape_cast %78 : vector<128x128xf32> to vector<8x16x128xf32>
    %cst_26 = arith.constant dense<0xFF800000> : vector<8x128xf32>
    %80 = vector.multi_reduction <maximumf>, %79, %cst_26 [1] : vector<8x16x128xf32> to vector<8x128xf32>
    %c0_27 = arith.constant 0 : index
    %c0_28 = arith.constant 0 : index
    %81 = vector.load %arg8[%c0_27, %c0_28] : memref<128x128xbf16, #tpu.memory_space<vmem>>, vector<128x128xbf16>
    %82 = arith.extf %81 : vector<128x128xbf16> to vector<128x128xf32>
    %cst_29 = arith.constant dense<0.000000e+00> : vector<8x128xf32>
    %83 = tpu.matmul %80, %82, %cst_29 {dimension_numbers = #tpu.dot_dimension_numbers<[1], [0], [0], [1], [0, 0, 1, 1], [], []>} : vector<8x128xf32>, vector<128x128xf32>, vector<8x128xf32> -> vector<8x128xf32>
    %c0_30 = arith.constant 0 : index
    %c0_31 = arith.constant 0 : index
    %84 = vector.load %arg9[%c0_30, %c0_31] : memref<1x128xf32, #tpu.memory_space<vmem>>, vector<1x128xf32>
    %85 = vector.broadcast %84 : vector<1x128xf32> to vector<8x128xf32>
    %86 = arith.addf %83, %85 : vector<8x128xf32>
    %c0_32 = arith.constant 0 : index
    %c0_33 = arith.constant 0 : index
    %87 = vector.load %arg10[%c0_32, %c0_33] : memref<8x128xf32, #tpu.memory_space<vmem>>, vector<8x128xf32>
    tpu.vector_store %arg10[%c0_32, %c0_33], %86 {strides = array<i32>} : memref<8x128xf32, #tpu.memory_space<vmem>>, vector<8x128xf32>,
    return
  }
  func.func @transform_0(%arg0: i32) -> (i32, i32) {
    %c0_i32 = arith.constant 0 : i32
    %c0_i32_0 = arith.constant 0 : i32
    return %arg0, %c0_i32 : i32, i32
  }
  func.func @transform_1(%arg0: i32) -> (i32, i32) {
    %c0_i32 = arith.constant 0 : i32
    %c0_i32_0 = arith.constant 0 : i32
    return %arg0, %c0_i32 : i32, i32
  }
  func.func @transform_2(%arg0: i32) -> (i32, i32) {
    %c0_i32 = arith.constant 0 : i32
    %c0_i32_0 = arith.constant 0 : i32
    %c0_i32_1 = arith.constant 0 : i32
    return %c0_i32, %c0_i32_0 : i32, i32
  }
  func.func @transform_3(%arg0: i32) -> (i32, i32) {
    %c0_i32 = arith.constant 0 : i32
    %c0_i32_0 = arith.constant 0 : i32
    %c0_i32_1 = arith.constant 0 : i32
    return %c0_i32, %c0_i32_0 : i32, i32
  }
  func.func @transform_4(%arg0: i32) -> (i32, i32) {
    %c0_i32 = arith.constant 0 : i32
    %c0_i32_0 = arith.constant 0 : i32
    %c0_i32_1 = arith.constant 0 : i32
    return %c0_i32, %c0_i32_0 : i32, i32
  }
  func.func @transform_5(%arg0: i32) -> (i32, i32) {
    %c0_i32 = arith.constant 0 : i32
    %c0_i32_0 = arith.constant 0 : i32
    %c0_i32_1 = arith.constant 0 : i32
    return %c0_i32, %c0_i32_0 : i32, i32
  }
  func.func @transform_6(%arg0: i32) -> (i32, i32) {
    %c0_i32 = arith.constant 0 : i32
    %c0_i32_0 = arith.constant 0 : i32
    %c0_i32_1 = arith.constant 0 : i32
    return %c0_i32, %c0_i32_0 : i32, i32
  }
  func.func @transform_7(%arg0: i32) -> (i32, i32) {
    %c0_i32 = arith.constant 0 : i32
    %c0_i32_0 = arith.constant 0 : i32
    %c0_i32_1 = arith.constant 0 : i32
    return %c0_i32, %c0_i32_0 : i32, i32
  }
  func.func @transform_8(%arg0: i32) -> (i32, i32) {
    %c0_i32 = arith.constant 0 : i32
    %c0_i32_0 = arith.constant 0 : i32
    %c0_i32_1 = arith.constant 0 : i32
    return %c0_i32, %c0_i32_0 : i32, i32
  }
  func.func @transform_9(%arg0: i32) -> (i32, i32) {
    %c0_i32 = arith.constant 0 : i32
    %c0_i32_0 = arith.constant 0 : i32
    return %arg0, %c0_i32 : i32, i32
  }
}

</mosaic_0001>

<llo_original>
// kernel: bert_cnn_forward.1
$region0: #{bert_cnn_forward.1}
  #allocation0 [shape = 'u32[]', space=smem, size = 0x4, offset = 0x4, fixed_abs, tag = 'smem constant byte address 0x4 - core index']
  #allocation1 [shape = 'u32[144,128]{1,0:T(1,128)}', space=vmem, size = 0x12000, scoped, tag = 'internal scratch']
  %s0 = inlined_call_operand.vmem [shape: s32[256,1], index: 0, kind: input, shape index: {}]
  %s1 = inlined_call_operand.vmem [shape: s32[256,1], index: 1, kind: input, shape index: {}]
  %s2 = inlined_call_operand.vmem [shape: f32[64,32], index: 2, kind: input, shape index: {}]
  %s3 = inlined_call_operand.vmem [shape: f32[32,32], index: 3, kind: input, shape index: {}]
  %s4 = inlined_call_operand.vmem [shape: f32[1,32], index: 4, kind: input, shape index: {}]
  %s5 = inlined_call_operand.vmem [shape: bf16[128,128], index: 5, kind: input, shape index: {}]
  %s6 = inlined_call_operand.vmem [shape: f32[1,128], index: 6, kind: input, shape index: {}]
  %s7 = inlined_call_operand.vmem [shape: bf16[128,128], index: 7, kind: input, shape index: {}]
  %s8 = inlined_call_operand.vmem [shape: f32[1,128], index: 8, kind: input, shape index: {}]
  %s9 = inlined_call_operand.vmem [shape: f32[16,128], index: 9, kind: output, shape index: {}]
  %s10 = sld [smem:[#allocation0]]
  $region69: #{bert_cnn_forward.1} parent=0
    _
  %s12 = ssub.s32 1, %s10
  %s13 = scalar_select 0, %s12, %s10
  loop: start=0, step=1, limit=4
  $region2: #{bert_cnn_forward.1} parent=0 // loop_pre_header
    _
  $region3: #{bert_cnn_forward.1} parent=0 // loop_header
    %s15 = sphi 0, %s19
    %p16 = scmp.ge.s32.totalorder %s15, 4
    %s25 = sphi 0, %s27
    %s28 = sphi 0, %s25
    %s29 = sphi 0, %s28
    %s45 = sphi 0, %s29
    %s51 = sphi 0, %s53
    %s54 = sphi 0, %s51
    %s55 = sphi 0, %s54
    %s71 = sphi 0, %s55
    %s75 = sphi 0, %s75
    %s77 = sphi 0, %s75
    %s78 = sphi 0, %s77
    %s92 = sphi 0, %s78
    %s96 = sphi 0, %s96
    %s98 = sphi 0, %s96
    %s99 = sphi 0, %s98
    %s113 = sphi 0, %s99
    %s117 = sphi 0, %s117
    %s119 = sphi 0, %s117
    %s120 = sphi 0, %s119
    %s134 = sphi 0, %s120
    %s138 = sphi 0, %s138
    %s140 = sphi 0, %s138
    %s141 = sphi 0, %s140
    %s155 = sphi 0, %s141
    %s159 = sphi 0, %s159
    %s161 = sphi 0, %s159
    %s162 = sphi 0, %s161
    %s176 = sphi 0, %s162
    %s180 = sphi 0, %s180
    %s182 = sphi 0, %s180
    %s183 = sphi 0, %s182
    %s197 = sphi 0, %s183
    %s201 = sphi 0, %s201
    %s203 = sphi 0, %s201
    %s204 = sphi 0, %s203
    %s218 = sphi 0, %s204
    %s224 = sphi 0, %s226
    %s227 = sphi 0, %s224
    %s228 = sphi 0, %s227
    %s244 = sphi 0, %s228
  $region4: #{bert_cnn_forward.1} parent=0 // loop_header_branch
    %18 = sbr.rel (%p16) target = $region8
  $region5: #{bert_cnn_forward.1} parent=0 // loop_body
    %s20 = ssub.s32 %s15, 1
    %s21 = ssub.s32 %s15, 2
    %s22 = sadd.s32 %s15, 1
    %s23 = ssub.s32 %s15, %s22
    %p24 = scmp.eq.s32.totalorder %s23, 0
    %s26 = sadd.s32 %s25, 1
    %s27 = scalar_select %p24, %s25, %s26
    %p30 = pneg %p24
    %p31 = scmp.eq.s32.totalorder %s15, 1
    %p32 = por %p30, %p31
    %p33 = scmp.ne.s32.totalorder %s25, %s28
    %p34 = scmp.eq.s32.totalorder %s15, 0
    %p35 = por %p33, %p34
    %p36 = scmp.ne.s32.totalorder %s25, %s28
    %p37 = scmp.eq.s32.totalorder %s20, 1
    %p38 = por %p36, %p37
    %p39 = scmp.ne.s32.totalorder %s28, %s29
    %p40 = scmp.eq.s32.totalorder %s20, 0
    %p41 = por %p39, %p40
    %p42 = scmp.ne.s32.totalorder %s28, %s29
    %p43 = scmp.eq.s32.totalorder %s21, 1
    %p44 = por %p42, %p43
    %p46 = scmp.ne.s32.totalorder %s29, %s45
    %p47 = scmp.eq.s32.totalorder %s21, 0
    %p48 = por %p46, %p47
    %s49 = ssub.s32 %s15, %s22
    %p50 = scmp.eq.s32.totalorder %s49, 0
    %s52 = sadd.s32 %s51, 1
    %s53 = scalar_select %p50, %s51, %s52
    %p56 = pneg %p50
    %p57 = scmp.eq.s32.totalorder %s15, 1
    %p58 = por %p56, %p57
    %p59 = scmp.ne.s32.totalorder %s51, %s54
    %p60 = scmp.eq.s32.totalorder %s15, 0
    %p61 = por %p59, %p60
    %p62 = scmp.ne.s32.totalorder %s51, %s54
    %p63 = scmp.eq.s32.totalorder %s20, 1
    %p64 = por %p62, %p63
    %p65 = scmp.ne.s32.totalorder %s54, %s55
    %p66 = scmp.eq.s32.totalorder %s20, 0
    %p67 = por %p65, %p66
    %p68 = scmp.ne.s32.totalorder %s54, %s55
    %p69 = scmp.eq.s32.totalorder %s21, 1
    %p70 = por %p68, %p69
    %p72 = scmp.ne.s32.totalorder %s55, %s71
    %p73 = scmp.eq.s32.totalorder %s21, 0
    %p74 = por %p72, %p73
    %s76 = sadd.s32 %s75, 1
    %p79 = scmp.eq.s32.totalorder %s15, 1
    %p80 = scmp.ne.s32.totalorder %s75, %s77
    %p81 = scmp.eq.s32.totalorder %s15, 0
    %p82 = por %p80, %p81
    %p83 = scmp.ne.s32.totalorder %s75, %s77
    %p84 = scmp.eq.s32.totalorder %s20, 1
    %p85 = por %p83, %p84
    %p86 = scmp.ne.s32.totalorder %s77, %s78
    %p87 = scmp.eq.s32.totalorder %s20, 0
    %p88 = por %p86, %p87
    %p89 = scmp.ne.s32.totalorder %s77, %s78
    %p90 = scmp.eq.s32.totalorder %s21, 1
    %p91 = por %p89, %p90
    %p93 = scmp.ne.s32.totalorder %s78, %s92
    %p94 = scmp.eq.s32.totalorder %s21, 0
    %p95 = por %p93, %p94
    %s97 = sadd.s32 %s96, 1
    %p100 = scmp.eq.s32.totalorder %s15, 1
    %p101 = scmp.ne.s32.totalorder %s96, %s98
    %p102 = scmp.eq.s32.totalorder %s15, 0
    %p103 = por %p101, %p102
    %p104 = scmp.ne.s32.totalorder %s96, %s98
    %p105 = scmp.eq.s32.totalorder %s20, 1
    %p106 = por %p104, %p105
    %p107 = scmp.ne.s32.totalorder %s98, %s99
    %p108 = scmp.eq.s32.totalorder %s20, 0
    %p109 = por %p107, %p108
    %p110 = scmp.ne.s32.totalorder %s98, %s99
    %p111 = scmp.eq.s32.totalorder %s21, 1
    %p112 = por %p110, %p111
    %p114 = scmp.ne.s32.totalorder %s99, %s113
    %p115 = scmp.eq.s32.totalorder %s21, 0
    %p116 = por %p114, %p115
    %s118 = sadd.s32 %s117, 1
    %p121 = scmp.eq.s32.totalorder %s15, 1
    %p122 = scmp.ne.s32.totalorder %s117, %s119
    %p123 = scmp.eq.s32.totalorder %s15, 0
    %p124 = por %p122, %p123
    %p125 = scmp.ne.s32.totalorder %s117, %s119
    %p126 = scmp.eq.s32.totalorder %s20, 1
    %p127 = por %p125, %p126
    %p128 = scmp.ne.s32.totalorder %s119, %s120
    %p129 = scmp.eq.s32.totalorder %s20, 0
    %p130 = por %p128, %p129
    %p131 = scmp.ne.s32.totalorder %s119, %s120
    %p132 = scmp.eq.s32.totalorder %s21, 1
    %p133 = por %p131, %p132
    %p135 = scmp.ne.s32.totalorder %s120, %s134
    %p136 = scmp.eq.s32.totalorder %s21, 0
    %p137 = por %p135, %p136
    %s139 = sadd.s32 %s138, 1
    %p142 = scmp.eq.s32.totalorder %s15, 1
    %p143 = scmp.ne.s32.totalorder %s138, %s140
    %p144 = scmp.eq.s32.totalorder %s15, 0
    %p145 = por %p143, %p144
    %p146 = scmp.ne.s32.totalorder %s138, %s140
    %p147 = scmp.eq.s32.totalorder %s20, 1
    %p148 = por %p146, %p147
    %p149 = scmp.ne.s32.totalorder %s140, %s141
    %p150 = scmp.eq.s32.totalorder %s20, 0
    %p151 = por %p149, %p150
    %p152 = scmp.ne.s32.totalorder %s140, %s141
    %p153 = scmp.eq.s32.totalorder %s21, 1
    %p154 = por %p152, %p153
    %p156 = scmp.ne.s32.totalorder %s141, %s155
    %p157 = scmp.eq.s32.totalorder %s21, 0
    %p158 = por %p156, %p157
    %s160 = sadd.s32 %s159, 1
    %p163 = scmp.eq.s32.totalorder %s15, 1
    %p164 = scmp.ne.s32.totalorder %s159, %s161
    %p165 = scmp.eq.s32.totalorder %s15, 0
    %p166 = por %p164, %p165
    %p167 = scmp.ne.s32.totalorder %s159, %s161
    %p168 = scmp.eq.s32.totalorder %s20, 1
    %p169 = por %p167, %p168
    %p170 = scmp.ne.s32.totalorder %s161, %s162
    %p171 = scmp.eq.s32.totalorder %s20, 0
    %p172 = por %p170, %p171
    %p173 = scmp.ne.s32.totalorder %s161, %s162
    %p174 = scmp.eq.s32.totalorder %s21, 1
    %p175 = por %p173, %p174
    %p177 = scmp.ne.s32.totalorder %s162, %s176
    %p178 = scmp.eq.s32.totalorder %s21, 0
    %p179 = por %p177, %p178
    %s181 = sadd.s32 %s180, 1
    %p184 = scmp.eq.s32.totalorder %s15, 1
    %p185 = scmp.ne.s32.totalorder %s180, %s182
    %p186 = scmp.eq.s32.totalorder %s15, 0
    %p187 = por %p185, %p186
    %p188 = scmp.ne.s32.totalorder %s180, %s182
    %p189 = scmp.eq.s32.totalorder %s20, 1
    %p190 = por %p188, %p189
    %p191 = scmp.ne.s32.totalorder %s182, %s183
    %p192 = scmp.eq.s32.totalorder %s20, 0
    %p193 = por %p191, %p192
    %p194 = scmp.ne.s32.totalorder %s182, %s183
    %p195 = scmp.eq.s32.totalorder %s21, 1
    %p196 = por %p194, %p195
    %p198 = scmp.ne.s32.totalorder %s183, %s197
    %p199 = scmp.eq.s32.totalorder %s21, 0
    %p200 = por %p198, %p199
    %s202 = sadd.s32 %s201, 1
    %p205 = scmp.eq.s32.totalorder %s15, 1
    %p206 = scmp.ne.s32.totalorder %s201, %s203
    %p207 = scmp.eq.s32.totalorder %s15, 0
    %p208 = por %p206, %p207
    %p209 = scmp.ne.s32.totalorder %s201, %s203
    %p210 = scmp.eq.s32.totalorder %s20, 1
    %p211 = por %p209, %p210
    %p212 = scmp.ne.s32.totalorder %s203, %s204
    %p213 = scmp.eq.s32.totalorder %s20, 0
    %p214 = por %p212, %p213
    %p215 = scmp.ne.s32.totalorder %s203, %s204
    %p216 = scmp.eq.s32.totalorder %s21, 1
    %p217 = por %p215, %p216
    %p219 = scmp.ne.s32.totalorder %s204, %s218
    %p220 = scmp.eq.s32.totalorder %s21, 0
    %p221 = por %p219, %p220
    %s222 = ssub.s32 %s15, %s22
    %p223 = scmp.eq.s32.totalorder %s222, 0
    %s225 = sadd.s32 %s224, 1
    %s226 = scalar_select %p223, %s224, %s225
    %p229 = pneg %p223
    %p230 = scmp.eq.s32.totalorder %s15, 1
    %p231 = por %p229, %p230
    %p232 = scmp.ne.s32.totalorder %s224, %s227
    %p233 = scmp.eq.s32.totalorder %s15, 0
    %p234 = por %p232, %p233
    %p235 = scmp.ne.s32.totalorder %s224, %s227
    %p236 = scmp.eq.s32.totalorder %s20, 1
    %p237 = por %p235, %p236
    %p238 = scmp.ne.s32.totalorder %s227, %s228
    %p239 = scmp.eq.s32.totalorder %s20, 0
    %p240 = por %p238, %p239
    %p241 = scmp.ne.s32.totalorder %s227, %s228
    %p242 = scmp.eq.s32.totalorder %s21, 1
    %p243 = por %p241, %p242
    %p245 = scmp.ne.s32.totalorder %s228, %s244
    %p246 = scmp.eq.s32.totalorder %s21, 0
    %p247 = por %p245, %p246
    %p248 = scmp.le.s32.totalorder 1, %s15
    %p249 = scmp.lt.s32.totalorder %s15, 3
    %p250 = pnand %p248, %p249
    %p251 = pneg %p250
    // Predicated region
    $region9: #{bert_cnn_forward.1} parent=5 // pred_check
      _
    $region10: #{bert_cnn_forward.1} parent=5 // pred_check_branch
      %253 = sbr.rel (%p250) target = $region12
    $region11: #{bert_cnn_forward.1} parent=5 // pred_region
      %s254 = ssub.s32 %s15, 1
      // Predicated region
      $region13: #{bert_cnn_forward.1} parent=11 // pred_check
        %p255 = pneg %p88
      $region14: #{bert_cnn_forward.1} parent=11 // pred_check_branch
        %257 = sbr.rel (%p255) target = $region16
      $region15: #{bert_cnn_forward.1} parent=11 // pred_region
        _
      $region16: #{bert_cnn_forward.1} parent=11 // pred_fallthru
        _
      // Predicated region
      $region17: #{bert_cnn_forward.1} parent=11 // pred_check
        %p258 = pneg %p109
      $region18: #{bert_cnn_forward.1} parent=11 // pred_check_branch
        %260 = sbr.rel (%p258) target = $region20
      $region19: #{bert_cnn_forward.1} parent=11 // pred_region
        _
      $region20: #{bert_cnn_forward.1} parent=11 // pred_fallthru
        _
      // Predicated region
      $region21: #{bert_cnn_forward.1} parent=11 // pred_check
        %p261 = pneg %p130
      $region22: #{bert_cnn_forward.1} parent=11 // pred_check_branch
        %263 = sbr.rel (%p261) target = $region24
      $region23: #{bert_cnn_forward.1} parent=11 // pred_region
        _
      $region24: #{bert_cnn_forward.1} parent=11 // pred_fallthru
        _
      // Predicated region
      $region25: #{bert_cnn_forward.1} parent=11 // pred_check
        %p264 = pneg %p151
      $region26: #{bert_cnn_forward.1} parent=11 // pred_check_branch
        %266 = sbr.rel (%p264) target = $region28
      $region27: #{bert_cnn_forward.1} parent=11 // pred_region
        _
      $region28: #{bert_cnn_forward.1} parent=11 // pred_fallthru
        _
      // Predicated region
      $region29: #{bert_cnn_forward.1} parent=11 // pred_check
        %p267 = pneg %p172
      $region30: #{bert_cnn_forward.1} parent=11 // pred_check_branch
        %269 = sbr.rel (%p267) target = $region32
      $region31: #{bert_cnn_forward.1} parent=11 // pred_region
        _
      $region32: #{bert_cnn_forward.1} parent=11 // pred_fallthru
        _
      // Predicated region
      $region33: #{bert_cnn_forward.1} parent=11 // pred_check
        %p270 = pneg %p193
      $region34: #{bert_cnn_forward.1} parent=11 // pred_check_branch
        %272 = sbr.rel (%p270) target = $region36
      $region35: #{bert_cnn_forward.1} parent=11 // pred_region
        _
      $region36: #{bert_cnn_forward.1} parent=11 // pred_fallthru
        _
      // Predicated region
      $region37: #{bert_cnn_forward.1} parent=11 // pred_check
        %p273 = pneg %p214
      $region38: #{bert_cnn_forward.1} parent=11 // pred_check_branch
        %275 = sbr.rel (%p273) target = $region40
      $region39: #{bert_cnn_forward.1} parent=11 // pred_region
        _
      $region40: #{bert_cnn_forward.1} parent=11 // pred_fallthru
        _
    $region12: #{bert_cnn_forward.1} parent=5 // pred_fallthru
      _
    %p276 = scmp.lt.s32.totalorder %s15, 2
    // Predicated region
    $region41: #{bert_cnn_forward.1} parent=5 // pred_check
      %p277 = pneg %p276
    $region42: #{bert_cnn_forward.1} parent=5 // pred_check_branch
      %279 = sbr.rel (%p277) target = $region44
    $region43: #{bert_cnn_forward.1} parent=5 // pred_region
      // Predicated region
      $region45: #{bert_cnn_forward.1} parent=43 // pred_check
        %p280 = pneg %p35
      $region46: #{bert_cnn_forward.1} parent=43 // pred_check_branch
        %282 = sbr.rel (%p280) target = $region48
      $region47: #{bert_cnn_forward.1} parent=43 // pred_region
        %s283 = smul.u32 16, %s15
        %p284 = scmp.lt.s32.totalorder %s283, 31
        %s285 = scalar_select %p284, %s283, 31
        %s286 = smul.addr %s285, 8
        %s287 = scalar_lea.vmem %s0, %s286
        %s288 = smul.u32 16, %s15
      $region48: #{bert_cnn_forward.1} parent=43 // pred_fallthru
        _
      // Predicated region
      $region49: #{bert_cnn_forward.1} parent=43 // pred_check
        %p289 = pneg %p61
      $region50: #{bert_cnn_forward.1} parent=43 // pred_check_branch
        %291 = sbr.rel (%p289) target = $region52
      $region51: #{bert_cnn_forward.1} parent=43 // pred_region
        %s292 = smul.u32 16, %s15
        %p293 = scmp.lt.s32.totalorder %s292, 31
        %s294 = scalar_select %p293, %s292, 31
        %s295 = smul.addr %s294, 8
        %s296 = scalar_lea.vmem %s1, %s295
        %s297 = smul.u32 16, %s15
      $region52: #{bert_cnn_forward.1} parent=43 // pred_fallthru
        _
    $region44: #{bert_cnn_forward.1} parent=5 // pred_fallthru
      _
    %p298 = scmp.le.s32.totalorder 1, %s15
    %p299 = scmp.lt.s32.totalorder %s15, 3
    %p300 = pnand %p298, %p299
    %p301 = pneg %p300
    // Predicated region
    $region53: #{bert_cnn_forward.1} parent=5 // pred_check
      _
    $region54: #{bert_cnn_forward.1} parent=5 // pred_check_branch
      %303 = sbr.rel (%p300) target = $region56
    $region55: #{bert_cnn_forward.1} parent=5 // pred_region
      %s304 = ssub.s32 %s15, 1
      %s305 = smul.u32 16, %s20
      %p306 = scmp.lt.s32.totalorder %s305, 31
      %s307 = scalar_select %p306, %s305, 31
      %s308 = smul.addr %s307, 8
      %s309 = scalar_lea.vmem %s0, %s308
      %p310 = pneg %p41
      %p311 = pneg %p38
      %s312 = smul.u32 16, %s20
      %p313 = scmp.lt.s32.totalorder %s312, 31
      %s314 = scalar_select %p313, %s312, 31
      %s315 = smul.addr %s314, 8
      %s316 = scalar_lea.vmem %s1, %s315
      %p317 = pneg %p67
      %p318 = pneg %p64
      %p319 = pneg %p88
      %p320 = pneg %p85
      %p321 = pneg %p109
      %p322 = pneg %p106
      %p323 = pneg %p130
      %p324 = pneg %p127
      %p325 = pneg %p151
      %p326 = pneg %p148
      %p327 = pneg %p172
      %p328 = pneg %p169
      %p329 = pneg %p193
      %p330 = pneg %p190
      %p331 = pneg %p214
      %p332 = pneg %p211
      %p333 = pneg %p240
      %p334 = pneg %p237
      %p335 = scmp.lt.s32.totalorder %s20, 1
      %s336 = scalar_select %p335, %s20, 1
      %s337 = smul.addr %s336, 8
      %s338 = scalar_lea.vmem %s9, %s337
      %s339 = smul.u32 16, %s20
      %p340 = scmp.lt.s32.totalorder %s339, 31
      %s341 = scalar_select %p340, %s339, 31
      %s342 = smul.addr %s341, 8
      %s343 = scalar_lea.vmem %s0, %s342
      %s344 = smul.u32 16, %s20
      %s345 = smul.u32 16, %s20
      %p346 = scmp.lt.s32.totalorder %s345, 31
      %s347 = scalar_select %p346, %s345, 31
      %s348 = smul.addr %s347, 8
      %s349 = scalar_lea.vmem %s1, %s348
      %s350 = smul.u32 16, %s20
      %p351 = scmp.lt.s32.totalorder %s20, 1
      %s352 = scalar_select %p351, %s20, 1
      %s353 = smul.addr %s352, 8
      %s354 = scalar_lea.vmem %s9, %s353
      %v355 = vld [vmem:[%s343] sm:$0xff]
      %v356 = vld [vmem:[%s343 + $0x8] sm:$0xff]
      %v357 = vld [vmem:[%s343 + $0x10] sm:$0xff]
      %v358 = vld [vmem:[%s343 + $0x18] sm:$0xff]
      %v359 = vld [vmem:[%s343 + $0x20] sm:$0xff]
      %v360 = vld [vmem:[%s343 + $0x28] sm:$0xff]
      %v361 = vld [vmem:[%s343 + $0x30] sm:$0xff]
      %v362 = vld [vmem:[%s343 + $0x38] sm:$0xff]
      %v363 = vld [vmem:[%s343 + $0x40] sm:$0xff]
      %v364 = vld [vmem:[%s343 + $0x48] sm:$0xff]
      %v365 = vld [vmem:[%s343 + $0x50] sm:$0xff]
      %v366 = vld [vmem:[%s343 + $0x58] sm:$0xff]
      %v367 = vld [vmem:[%s343 + $0x60] sm:$0xff]
      %v368 = vld [vmem:[%s343 + $0x68] sm:$0xff]
      %v369 = vld [vmem:[%s343 + $0x70] sm:$0xff]
      %v370 = vld [vmem:[%s343 + $0x78] sm:$0xff]
      %v371 = vlaneseq
      %v372 = vand.u32 %v371, 127
      %373 = vset.pattern.permute.xlu0 0
      %374 = vperm.xlu0 %373, %v355
      %v375 = vpop.permute.xlu0 %374
      %376 = vset.pattern.permute.xlu0 0
      %377 = vperm.xlu0 %376, %v356
      %v378 = vpop.permute.xlu0 %377
      %379 = vset.pattern.permute.xlu0 0
      %380 = vperm.xlu0 %379, %v357
      %v381 = vpop.permute.xlu0 %380
      %382 = vset.pattern.permute.xlu0 0
      %383 = vperm.xlu0 %382, %v358
      %v384 = vpop.permute.xlu0 %383
      %385 = vset.pattern.permute.xlu0 0
      %386 = vperm.xlu0 %385, %v359
      %v387 = vpop.permute.xlu0 %386
      %388 = vset.pattern.permute.xlu0 0
      %389 = vperm.xlu0 %388, %v360
      %v390 = vpop.permute.xlu0 %389
      %391 = vset.pattern.permute.xlu0 0
      %392 = vperm.xlu0 %391, %v361
      %v393 = vpop.permute.xlu0 %392
      %394 = vset.pattern.permute.xlu0 0
      %395 = vperm.xlu0 %394, %v362
      %v396 = vpop.permute.xlu0 %395
      %397 = vset.pattern.permute.xlu0 0
      %398 = vperm.xlu0 %397, %v363
      %v399 = vpop.permute.xlu0 %398
      %400 = vset.pattern.permute.xlu0 0
      %401 = vperm.xlu0 %400, %v364
      %v402 = vpop.permute.xlu0 %401
      %403 = vset.pattern.permute.xlu0 0
      %404 = vperm.xlu0 %403, %v365
      %v405 = vpop.permute.xlu0 %404
      %406 = vset.pattern.permute.xlu0 0
      %407 = vperm.xlu0 %406, %v366
      %v408 = vpop.permute.xlu0 %407
      %409 = vset.pattern.permute.xlu0 0
      %410 = vperm.xlu0 %409, %v367
      %v411 = vpop.permute.xlu0 %410
      %412 = vset.pattern.permute.xlu0 0
      %413 = vperm.xlu0 %412, %v368
      %v414 = vpop.permute.xlu0 %413
      %415 = vset.pattern.permute.xlu0 0
      %416 = vperm.xlu0 %415, %v369
      %v417 = vpop.permute.xlu0 %416
      %418 = vset.pattern.permute.xlu0 0
      %419 = vperm.xlu0 %418, %v370
      %v420 = vpop.permute.xlu0 %419
      %vm421 = vcmp.eq.s32.totalorder %v372, %v375
      %vm422 = vcmp.eq.s32.totalorder %v372, %v378
      %vm423 = vcmp.eq.s32.totalorder %v372, %v381
      %vm424 = vcmp.eq.s32.totalorder %v372, %v384
      %vm425 = vcmp.eq.s32.totalorder %v372, %v387
      %vm426 = vcmp.eq.s32.totalorder %v372, %v390
      %vm427 = vcmp.eq.s32.totalorder %v372, %v393
      %vm428 = vcmp.eq.s32.totalorder %v372, %v396
      %vm429 = vcmp.eq.s32.totalorder %v372, %v399
      %vm430 = vcmp.eq.s32.totalorder %v372, %v402
      %vm431 = vcmp.eq.s32.totalorder %v372, %v405
      %vm432 = vcmp.eq.s32.totalorder %v372, %v408
      %vm433 = vcmp.eq.s32.totalorder %v372, %v411
      %vm434 = vcmp.eq.s32.totalorder %v372, %v414
      %vm435 = vcmp.eq.s32.totalorder %v372, %v417
      %vm436 = vcmp.eq.s32.totalorder %v372, %v420
      %v437 = vsel %vm421, 1.0, 0.0
      %v438 = vsel %vm422, 1.0, 0.0
      %v439 = vsel %vm423, 1.0, 0.0
      %v440 = vsel %vm424, 1.0, 0.0
      %v441 = vsel %vm425, 1.0, 0.0
      %v442 = vsel %vm426, 1.0, 0.0
      %v443 = vsel %vm427, 1.0, 0.0
      %v444 = vsel %vm428, 1.0, 0.0
      %v445 = vsel %vm429, 1.0, 0.0
      %v446 = vsel %vm430, 1.0, 0.0
      %v447 = vsel %vm431, 1.0, 0.0
      %v448 = vsel %vm432, 1.0, 0.0
      %v449 = vsel %vm433, 1.0, 0.0
      %v450 = vsel %vm434, 1.0, 0.0
      %v451 = vsel %vm435, 1.0, 0.0
      %v452 = vsel %vm436, 1.0, 0.0
      %v453 = vld [vmem:[%s2] sm:$0xff]
      %v454 = vld [vmem:[%s2 + $0x8] sm:$0xff]
      %v455 = vld [vmem:[%s2 + $0x10] sm:$0xff]
      %v456 = vld [vmem:[%s2 + $0x18] sm:$0xff]
      %v457 = vld [vmem:[%s2 + $0x20] sm:$0xff]
      %v458 = vld [vmem:[%s2 + $0x28] sm:$0xff]
      %v459 = vld [vmem:[%s2 + $0x30] sm:$0xff]
      %v460 = vld [vmem:[%s2 + $0x38] sm:$0xff]
      %vm461 = vcmask 523264
      %v463 = vsel %vm461, %v437, 0
      %v466 = vsel %vm461, %v438, 0
      %v469 = vsel %vm461, %v439, 0
      %v472 = vsel %vm461, %v440, 0
      %v475 = vsel %vm461, %v441, 0
      %v478 = vsel %vm461, %v442, 0
      %v481 = vsel %vm461, %v443, 0
      %v484 = vsel %vm461, %v444, 0
      %v487 = vsel %vm461, %v445, 0
      %v490 = vsel %vm461, %v446, 0
      %v493 = vsel %vm461, %v447, 0
      %v496 = vsel %vm461, %v448, 0
      %v499 = vsel %vm461, %v449, 0
      %v502 = vsel %vm461, %v450, 0
      %v505 = vsel %vm461, %v451, 0
      %v508 = vsel %vm461, %v452, 0
      %510 = vmatprep.subr.mxu0 0.0
      %511 = vmatpush1.msra.mxu0 %v453
      %512 = vmatprep.subr.mxu0 0.0
      %513 = vmatpush1.msra.mxu0 %v454
      %514 = vmatprep.subr.mxu0 0.0
      %515 = vmatpush1.msra.mxu0 %v455
      %516 = vmatprep.subr.mxu0 0.0
      %517 = vmatpush1.msra.mxu0 %v456
      %518 = vmatprep.subr.mxu0 0.0
      %519 = vmatpush1.msra.mxu0 %v457
      %520 = vmatprep.subr.mxu0 0.0
      %521 = vmatpush1.msra.mxu0 %v458
      %522 = vmatprep.subr.mxu0 0.0
      %523 = vmatpush1.msra.mxu0 %v459
      %524 = vmatprep.subr.mxu0 0.0
      %525 = vmatpush1.msra.mxu0 %v460
      %526 = vmatprep.subr.mxu0 0.0
      %527 = vmatpush1.msra.mxu0 0.0
      %528 = vmatprep.subr.mxu0 0.0
      %529 = vmatpush1.msra.mxu0 0.0
      %530 = vmatprep.subr.mxu0 0.0
      %531 = vmatpush1.msra.mxu0 0.0
      %532 = vmatprep.subr.mxu0 0.0
      %533 = vmatpush1.msra.mxu0 0.0
      %534 = vmatprep.subr.mxu0 0.0
      %535 = vmatpush1.msra.mxu0 0.0
      %536 = vmatprep.subr.mxu0 0.0
      %537 = vmatpush1.msra.mxu0 0.0
      %538 = vmatprep.subr.mxu0 0.0
      %539 = vmatpush1.msra.mxu0 0.0
      %540 = vmatprep.subr.mxu0 0.0
      %541 = vmatpush1.msra.mxu0 0.0
      %542 = vmatprep.subr.mxu0 0.0
      %543 = vmatpush1.msra.mxu0 0.0
      %544 = vmatprep.subr.mxu0 0.0
      %545 = vmatpush1.msra.mxu0 0.0
      %546 = vmatprep.subr.mxu0 0.0
      %547 = vmatpush1.msra.mxu0 0.0
      %548 = vmatprep.subr.mxu0 0.0
      %549 = vmatpush1.msra.mxu0 0.0
      %550 = vmatprep.subr.mxu0 0.0
      %551 = vmatpush1.msra.mxu0 0.0
      %552 = vmatprep.subr.mxu0 0.0
      %553 = vmatpush1.msra.mxu0 0.0
      %554 = vmatprep.subr.mxu0 0.0
      %555 = vmatpush1.msra.mxu0 0.0
      %556 = vmatprep.subr.mxu0 0.0
      %557 = vmatpush1.msra.mxu0 0.0
      %558 = vmatprep.subr.mxu0 0.0
      %559 = vmatpush1.msra.mxu0 0.0
      %560 = vmatprep.subr.mxu0 0.0
      %561 = vmatpush1.msra.mxu0 0.0
      %562 = vmatprep.subr.mxu0 0.0
      %563 = vmatpush1.msra.mxu0 0.0
      %564 = vmatprep.subr.mxu0 0.0
      %565 = vmatpush1.msra.mxu0 0.0
      %566 = vmatprep.subr.mxu0 0.0
      %567 = vmatpush1.msra.mxu0 0.0
      %568 = vmatprep.subr.mxu0 0.0
      %569 = vmatpush1.msra.mxu0 0.0
      %570 = vmatprep.subr.mxu0 0.0
      %571 = vmatpush1.msra.mxu0 0.0
      %572 = vmatprep.subr.mxu0 0.0
      %573 = vmatpush1.msra.mxu0 0.0
      %574 = vmatprep.mubr.f32.mxu0 0.0
      %575 = vmatmul.mubr.f32.gmra.mrb[0].mxu0 %v463
      %v576 = vpop.f32.mrb[0].mxu0
      %v577 = vadd.f32 0.0, %v576
      %v578 = vpop.f32.mrb[0].mxu0
      %579 = vmatprep.mubr.f32.mxu0 0.0
      %580 = vmatmul.mubr.f32.gmra.mrb[0].mxu0 %v466
      %v581 = vpop.f32.mrb[0].mxu0
      %v582 = vadd.f32 0.0, %v581
      %v583 = vpop.f32.mrb[0].mxu0
      %584 = vmatprep.mubr.f32.mxu0 0.0
      %585 = vmatmul.mubr.f32.gmra.mrb[0].mxu0 %v469
      %v586 = vpop.f32.mrb[0].mxu0
      %v587 = vadd.f32 0.0, %v586
      %v588 = vpop.f32.mrb[0].mxu0
      %589 = vmatprep.mubr.f32.mxu0 0.0
      %590 = vmatmul.mubr.f32.gmra.mrb[0].mxu0 %v472
      %v591 = vpop.f32.mrb[0].mxu0
      %v592 = vadd.f32 0.0, %v591
      %v593 = vpop.f32.mrb[0].mxu0
      %594 = vmatprep.mubr.f32.mxu0 0.0
      %595 = vmatmul.mubr.f32.gmra.mrb[0].mxu0 %v475
      %v596 = vpop.f32.mrb[0].mxu0
      %v597 = vadd.f32 0.0, %v596
      %v598 = vpop.f32.mrb[0].mxu0
      %599 = vmatprep.mubr.f32.mxu0 0.0
      %600 = vmatmul.mubr.f32.gmra.mrb[0].mxu0 %v478
      %v601 = vpop.f32.mrb[0].mxu0
      %v602 = vadd.f32 0.0, %v601
      %v603 = vpop.f32.mrb[0].mxu0
      %604 = vmatprep.mubr.f32.mxu0 0.0
      %605 = vmatmul.mubr.f32.gmra.mrb[0].mxu0 %v481
      %v606 = vpop.f32.mrb[0].mxu0
      %v607 = vadd.f32 0.0, %v606
      %v608 = vpop.f32.mrb[0].mxu0
      %609 = vmatprep.mubr.f32.mxu0 0.0
      %610 = vmatmul.mubr.f32.gmra.mrb[0].mxu0 %v484
      %v611 = vpop.f32.mrb[0].mxu0
      %v612 = vadd.f32 0.0, %v611
      %v613 = vpop.f32.mrb[0].mxu0
      %614 = vmatprep.mubr.f32.mxu0 0.0
      %615 = vmatmul.mubr.f32.gmra.mrb[0].mxu0 %v487
      %v616 = vpop.f32.mrb[0].mxu0
      %v617 = vadd.f32 0.0, %v616
      %v618 = vpop.f32.mrb[0].mxu0
      %619 = vmatprep.mubr.f32.mxu0 0.0
      %620 = vmatmul.mubr.f32.gmra.mrb[0].mxu0 %v490
      %v621 = vpop.f32.mrb[0].mxu0
      %v622 = vadd.f32 0.0, %v621
      %v623 = vpop.f32.mrb[0].mxu0
      %624 = vmatprep.mubr.f32.mxu0 0.0
      %625 = vmatmul.mubr.f32.gmra.mrb[0].mxu0 %v493
      %v626 = vpop.f32.mrb[0].mxu0
      %v627 = vadd.f32 0.0, %v626
      %v628 = vpop.f32.mrb[0].mxu0
      %629 = vmatprep.mubr.f32.mxu0 0.0
      %630 = vmatmul.mubr.f32.gmra.mrb[0].mxu0 %v496
      %v631 = vpop.f32.mrb[0].mxu0
      %v632 = vadd.f32 0.0, %v631
      %v633 = vpop.f32.mrb[0].mxu0
      %634 = vmatprep.mubr.f32.mxu0 0.0
      %635 = vmatmul.mubr.f32.gmra.mrb[0].mxu0 %v499
      %v636 = vpop.f32.mrb[0].mxu0
      %v637 = vadd.f32 0.0, %v636
      %v638 = vpop.f32.mrb[0].mxu0
      %639 = vmatprep.mubr.f32.mxu0 0.0
      %640 = vmatmul.mubr.f32.gmra.mrb[0].mxu0 %v502
      %v641 = vpop.f32.mrb[0].mxu0
      %v642 = vadd.f32 0.0, %v641
      %v643 = vpop.f32.mrb[0].mxu0
      %644 = vmatprep.mubr.f32.mxu0 0.0
      %645 = vmatmul.mubr.f32.gmra.mrb[0].mxu0 %v505
      %v646 = vpop.f32.mrb[0].mxu0
      %v647 = vadd.f32 0.0, %v646
      %v648 = vpop.f32.mrb[0].mxu0
      %649 = vmatprep.mubr.f32.mxu0 0.0
      %650 = vmatmul.mubr.f32.gmra.mrb[0].mxu0 %v508
      %v651 = vpop.f32.mrb[0].mxu0
      %v652 = vadd.f32 0.0, %v651
      %v653 = vpop.f32.mrb[0].mxu0
      %654 = vdwg.mxu0
      %v655 = vld [vmem:[%s3] sm:$0xff]
      %v656 = vld [vmem:[%s3 + $0x8] sm:$0xff]
      %v657 = vld [vmem:[%s3 + $0x10] sm:$0xff]
      %v658 = vld [vmem:[%s3 + $0x18] sm:$0xff]
      %v659 = vld [vmem:[%s4] sm:$0x1]
      %v661 = vlaneseq
      %v662 = vshrl.u32 %v661, 7
      %v663 = vsub.s32 0, %v662
      %v664 = vrot.slane %v659, %v663
      %vm666 = vcmask 261120
      %v668 = vsel %vm666, %v577, 0
      %v671 = vsel %vm666, %v582, 0
      %v674 = vsel %vm666, %v587, 0
      %v677 = vsel %vm666, %v592, 0
      %v680 = vsel %vm666, %v597, 0
      %v683 = vsel %vm666, %v602, 0
      %v686 = vsel %vm666, %v607, 0
      %v689 = vsel %vm666, %v612, 0
      %v692 = vsel %vm666, %v617, 0
      %v695 = vsel %vm666, %v622, 0
      %v698 = vsel %vm666, %v627, 0
      %v701 = vsel %vm666, %v632, 0
      %v704 = vsel %vm666, %v637, 0
      %v707 = vsel %vm666, %v642, 0
      %v710 = vsel %vm666, %v647, 0
      %v713 = vsel %vm666, %v652, 0
      %715 = vmatprep.subr.mxu0 0.0
      %716 = vmatpush1.msra.mxu0 %v655
      %717 = vmatprep.subr.mxu0 0.0
      %718 = vmatpush1.msra.mxu0 %v656
      %719 = vmatprep.subr.mxu0 0.0
      %720 = vmatpush1.msra.mxu0 %v657
      %721 = vmatprep.subr.mxu0 0.0
      %722 = vmatpush1.msra.mxu0 %v658
      %723 = vmatprep.subr.mxu0 0.0
      %724 = vmatpush1.msra.mxu0 0.0
      %725 = vmatprep.subr.mxu0 0.0
      %726 = vmatpush1.msra.mxu0 0.0
      %727 = vmatprep.subr.mxu0 0.0
      %728 = vmatpush1.msra.mxu0 0.0
      %729 = vmatprep.subr.mxu0 0.0
      %730 = vmatpush1.msra.mxu0 0.0
      %731 = vmatprep.subr.mxu0 0.0
      %732 = vmatpush1.msra.mxu0 0.0
      %733 = vmatprep.subr.mxu0 0.0
      %734 = vmatpush1.msra.mxu0 0.0
      %735 = vmatprep.subr.mxu0 0.0
      %736 = vmatpush1.msra.mxu0 0.0
      %737 = vmatprep.subr.mxu0 0.0
      %738 = vmatpush1.msra.mxu0 0.0
      %739 = vmatprep.subr.mxu0 0.0
      %740 = vmatpush1.msra.mxu0 0.0
      %741 = vmatprep.subr.mxu0 0.0
      %742 = vmatpush1.msra.mxu0 0.0
      %743 = vmatprep.subr.mxu0 0.0
      %744 = vmatpush1.msra.mxu0 0.0
      %745 = vmatprep.subr.mxu0 0.0
      %746 = vmatpush1.msra.mxu0 0.0
      %747 = vmatprep.subr.mxu0 0.0
      %748 = vmatpush1.msra.mxu0 0.0
      %749 = vmatprep.subr.mxu0 0.0
      %750 = vmatpush1.msra.mxu0 0.0
      %751 = vmatprep.subr.mxu0 0.0
      %752 = vmatpush1.msra.mxu0 0.0
      %753 = vmatprep.subr.mxu0 0.0
      %754 = vmatpush1.msra.mxu0 0.0
      %755 = vmatprep.subr.mxu0 0.0
      %756 = vmatpush1.msra.mxu0 0.0
      %757 = vmatprep.subr.mxu0 0.0
      %758 = vmatpush1.msra.mxu0 0.0
      %759 = vmatprep.subr.mxu0 0.0
      %760 = vmatpush1.msra.mxu0 0.0
      %761 = vmatprep.subr.mxu0 0.0
      %762 = vmatpush1.msra.mxu0 0.0
      %763 = vmatprep.subr.mxu0 0.0
      %764 = vmatpush1.msra.mxu0 0.0
      %765 = vmatprep.subr.mxu0 0.0
      %766 = vmatpush1.msra.mxu0 0.0
      %767 = vmatprep.subr.mxu0 0.0
      %768 = vmatpush1.msra.mxu0 0.0
      %769 = vmatprep.subr.mxu0 0.0
      %770 = vmatpush1.msra.mxu0 0.0
      %771 = vmatprep.subr.mxu0 0.0
      %772 = vmatpush1.msra.mxu0 0.0
      %773 = vmatprep.subr.mxu0 0.0
      %774 = vmatpush1.msra.mxu0 0.0
      %775 = vmatprep.subr.mxu0 0.0
      %776 = vmatpush1.msra.mxu0 0.0
      %777 = vmatprep.subr.mxu0 0.0
      %778 = vmatpush1.msra.mxu0 0.0
      %779 = vmatprep.mubr.f32.mxu0 0.0
      %780 = vmatmul.mubr.f32.gmra.mrb[0].mxu0 %v668
      %v781 = vpop.f32.mrb[0].mxu0
      %v782 = vadd.f32 %v664, %v781
      %v783 = vpop.f32.mrb[0].mxu0
      %784 = vmatprep.mubr.f32.mxu0 0.0
      %785 = vmatmul.mubr.f32.gmra.mrb[0].mxu0 %v671
      %v786 = vpop.f32.mrb[0].mxu0
      %v787 = vadd.f32 %v664, %v786
      %v788 = vpop.f32.mrb[0].mxu0
      %789 = vmatprep.mubr.f32.mxu0 0.0
      %790 = vmatmul.mubr.f32.gmra.mrb[0].mxu0 %v674
      %v791 = vpop.f32.mrb[0].mxu0
      %v792 = vadd.f32 %v664, %v791
      %v793 = vpop.f32.mrb[0].mxu0
      %794 = vmatprep.mubr.f32.mxu0 0.0
      %795 = vmatmul.mubr.f32.gmra.mrb[0].mxu0 %v677
      %v796 = vpop.f32.mrb[0].mxu0
      %v797 = vadd.f32 %v664, %v796
      %v798 = vpop.f32.mrb[0].mxu0
      %799 = vmatprep.mubr.f32.mxu0 0.0
      %800 = vmatmul.mubr.f32.gmra.mrb[0].mxu0 %v680
      %v801 = vpop.f32.mrb[0].mxu0
      %v802 = vadd.f32 %v664, %v801
      %v803 = vpop.f32.mrb[0].mxu0
      %804 = vmatprep.mubr.f32.mxu0 0.0
      %805 = vmatmul.mubr.f32.gmra.mrb[0].mxu0 %v683
      %v806 = vpop.f32.mrb[0].mxu0
      %v807 = vadd.f32 %v664, %v806
      %v808 = vpop.f32.mrb[0].mxu0
      %809 = vmatprep.mubr.f32.mxu0 0.0
      %810 = vmatmul.mubr.f32.gmra.mrb[0].mxu0 %v686
      %v811 = vpop.f32.mrb[0].mxu0
      %v812 = vadd.f32 %v664, %v811
      %v813 = vpop.f32.mrb[0].mxu0
      %814 = vmatprep.mubr.f32.mxu0 0.0
      %815 = vmatmul.mubr.f32.gmra.mrb[0].mxu0 %v689
      %v816 = vpop.f32.mrb[0].mxu0
      %v817 = vadd.f32 %v664, %v816
      %v818 = vpop.f32.mrb[0].mxu0
      %819 = vmatprep.mubr.f32.mxu0 0.0
      %820 = vmatmul.mubr.f32.gmra.mrb[0].mxu0 %v692
      %v821 = vpop.f32.mrb[0].mxu0
      %v822 = vadd.f32 %v664, %v821
      %v823 = vpop.f32.mrb[0].mxu0
      %824 = vmatprep.mubr.f32.mxu0 0.0
      %825 = vmatmul.mubr.f32.gmra.mrb[0].mxu0 %v695
      %v826 = vpop.f32.mrb[0].mxu0
      %v827 = vadd.f32 %v664, %v826
      %v828 = vpop.f32.mrb[0].mxu0
      %829 = vmatprep.mubr.f32.mxu0 0.0
      %830 = vmatmul.mubr.f32.gmra.mrb[0].mxu0 %v698
      %v831 = vpop.f32.mrb[0].mxu0
      %v832 = vadd.f32 %v664, %v831
      %v833 = vpop.f32.mrb[0].mxu0
      %834 = vmatprep.mubr.f32.mxu0 0.0
      %835 = vmatmul.mubr.f32.gmra.mrb[0].mxu0 %v701
      %v836 = vpop.f32.mrb[0].mxu0
      %v837 = vadd.f32 %v664, %v836
      %v838 = vpop.f32.mrb[0].mxu0
      %839 = vmatprep.mubr.f32.mxu0 0.0
      %840 = vmatmul.mubr.f32.gmra.mrb[0].mxu0 %v704
      %v841 = vpop.f32.mrb[0].mxu0
      %v842 = vadd.f32 %v664, %v841
      %v843 = vpop.f32.mrb[0].mxu0
      %844 = vmatprep.mubr.f32.mxu0 0.0
      %845 = vmatmul.mubr.f32.gmra.mrb[0].mxu0 %v707
      %v846 = vpop.f32.mrb[0].mxu0
      %v847 = vadd.f32 %v664, %v846
      %v848 = vpop.f32.mrb[0].mxu0
      %849 = vmatprep.mubr.f32.mxu0 0.0
      %850 = vmatmul.mubr.f32.gmra.mrb[0].mxu0 %v710
      %v851 = vpop.f32.mrb[0].mxu0
      %v852 = vadd.f32 %v664, %v851
      %v853 = vpop.f32.mrb[0].mxu0
      %854 = vmatprep.mubr.f32.mxu0 0.0
      %855 = vmatmul.mubr.f32.gmra.mrb[0].mxu0 %v713
      %v856 = vpop.f32.mrb[0].mxu0
      %v857 = vadd.f32 %v664, %v856
      %v858 = vpop.f32.mrb[0].mxu0
      %859 = vdwg.mxu0
      %v860 = vtanh.pop %v782
      %v861 = vtanh.pop %v787
      %v862 = vtanh.pop %v792
      %v863 = vtanh.pop %v797
      %v864 = vtanh.pop %v802
      %v865 = vtanh.pop %v807
      %v866 = vtanh.pop %v812
      %v867 = vtanh.pop %v817
      %v868 = vtanh.pop %v822
      %v869 = vtanh.pop %v827
      %v870 = vtanh.pop %v832
      %v871 = vtanh.pop %v837
      %v872 = vtanh.pop %v842
      %v873 = vtanh.pop %v847
      %v874 = vtanh.pop %v852
      %v875 = vtanh.pop %v857
      %v876 = vld [vmem:[%s349] sm:$0xff]
      %v877 = vld [vmem:[%s349 + $0x8] sm:$0xff]
      %v878 = vld [vmem:[%s349 + $0x10] sm:$0xff]
      %v879 = vld [vmem:[%s349 + $0x18] sm:$0xff]
      %v880 = vld [vmem:[%s349 + $0x20] sm:$0xff]
      %v881 = vld [vmem:[%s349 + $0x28] sm:$0xff]
      %v882 = vld [vmem:[%s349 + $0x30] sm:$0xff]
      %v883 = vld [vmem:[%s349 + $0x38] sm:$0xff]
      %v884 = vld [vmem:[%s349 + $0x40] sm:$0xff]
      %v885 = vld [vmem:[%s349 + $0x48] sm:$0xff]
      %v886 = vld [vmem:[%s349 + $0x50] sm:$0xff]
      %v887 = vld [vmem:[%s349 + $0x58] sm:$0xff]
      %v888 = vld [vmem:[%s349 + $0x60] sm:$0xff]
      %v889 = vld [vmem:[%s349 + $0x68] sm:$0xff]
      %v890 = vld [vmem:[%s349 + $0x70] sm:$0xff]
      %v891 = vld [vmem:[%s349 + $0x78] sm:$0xff]
      %v892 = vcvt.s32.f32 %v876
      %v893 = vcvt.s32.f32 %v877
      %v894 = vcvt.s32.f32 %v878
      %v895 = vcvt.s32.f32 %v879
      %v896 = vcvt.s32.f32 %v880
      %v897 = vcvt.s32.f32 %v881
      %v898 = vcvt.s32.f32 %v882
      %v899 = vcvt.s32.f32 %v883
      %v900 = vcvt.s32.f32 %v884
      %v901 = vcvt.s32.f32 %v885
      %v902 = vcvt.s32.f32 %v886
      %v903 = vcvt.s32.f32 %v887
      %v904 = vcvt.s32.f32 %v888
      %v905 = vcvt.s32.f32 %v889
      %v906 = vcvt.s32.f32 %v890
      %v907 = vcvt.s32.f32 %v891
      %909 = vset.pattern.permute.xlu0 0
      %910 = vperm.xlu0 %909, %v892
      %v911 = vpop.permute.xlu0 %910
      %914 = vset.pattern.permute.xlu0 0
      %915 = vperm.xlu0 %914, %v893
      %v916 = vpop.permute.xlu0 %915
      %919 = vset.pattern.permute.xlu0 0
      %920 = vperm.xlu0 %919, %v894
      %v921 = vpop.permute.xlu0 %920
      %924 = vset.pattern.permute.xlu0 0
      %925 = vperm.xlu0 %924, %v895
      %v926 = vpop.permute.xlu0 %925
      %929 = vset.pattern.permute.xlu0 0
      %930 = vperm.xlu0 %929, %v896
      %v931 = vpop.permute.xlu0 %930
      %934 = vset.pattern.permute.xlu0 0
      %935 = vperm.xlu0 %934, %v897
      %v936 = vpop.permute.xlu0 %935
      %939 = vset.pattern.permute.xlu0 0
      %940 = vperm.xlu0 %939, %v898
      %v941 = vpop.permute.xlu0 %940
      %944 = vset.pattern.permute.xlu0 0
      %945 = vperm.xlu0 %944, %v899
      %v946 = vpop.permute.xlu0 %945
      %949 = vset.pattern.permute.xlu0 0
      %950 = vperm.xlu0 %949, %v900
      %v951 = vpop.permute.xlu0 %950
      %954 = vset.pattern.permute.xlu0 0
      %955 = vperm.xlu0 %954, %v901
      %v956 = vpop.permute.xlu0 %955
      %959 = vset.pattern.permute.xlu0 0
      %960 = vperm.xlu0 %959, %v902
      %v961 = vpop.permute.xlu0 %960
      %964 = vset.pattern.permute.xlu0 0
      %965 = vperm.xlu0 %964, %v903
      %v966 = vpop.permute.xlu0 %965
      %969 = vset.pattern.permute.xlu0 0
      %970 = vperm.xlu0 %969, %v904
      %v971 = vpop.permute.xlu0 %970
      %974 = vset.pattern.permute.xlu0 0
      %975 = vperm.xlu0 %974, %v905
      %v976 = vpop.permute.xlu0 %975
      %979 = vset.pattern.permute.xlu0 0
      %980 = vperm.xlu0 %979, %v906
      %v981 = vpop.permute.xlu0 %980
      %984 = vset.pattern.permute.xlu0 0
      %985 = vperm.xlu0 %984, %v907
      %v986 = vpop.permute.xlu0 %985
      %v988 = vmul.f32 %v860, %v911
      %v989 = vmul.f32 %v861, %v916
      %v990 = vmul.f32 %v862, %v921
      %v991 = vmul.f32 %v863, %v926
      %v992 = vmul.f32 %v864, %v931
      %v993 = vmul.f32 %v865, %v936
      %v994 = vmul.f32 %v866, %v941
      %v995 = vmul.f32 %v867, %v946
      %v996 = vmul.f32 %v868, %v951
      %v997 = vmul.f32 %v869, %v956
      %v998 = vmul.f32 %v870, %v961
      %v999 = vmul.f32 %v871, %v966
      %v1000 = vmul.f32 %v872, %v971
      %v1001 = vmul.f32 %v873, %v976
      %v1002 = vmul.f32 %v874, %v981
      %v1003 = vmul.f32 %v875, %v986
      %v1004 = vrot.slane %v988, 1
      %v1005 = vrot.slane %v989, 1
      %v1006 = vrot.slane %v990, 1
      %v1007 = vrot.slane %v991, 1
      %v1008 = vrot.slane %v992, 1
      %v1009 = vrot.slane %v993, 1
      %v1010 = vrot.slane %v994, 1
      %v1011 = vrot.slane %v995, 1
      %v1012 = vrot.slane %v996, 1
      %v1013 = vrot.slane %v997, 1
      %v1014 = vrot.slane %v998, 1
      %v1015 = vrot.slane %v999, 1
      %v1016 = vrot.slane %v1000, 1
      %v1017 = vrot.slane %v1001, 1
      %v1018 = vrot.slane %v1002, 1
      %v1019 = vrot.slane %v1003, 1
      %v1020 = vlaneseq
      %v1021 = vshrl.u32 %v1020, 7
      %vm1022 = vcmp.lt.s32.totalorder %v1021, 7
      %v1023 = vsel %vm1022, %v1018, %v1019
      %v1024 = vsel %vm1022, %v1017, %v1018
      %v1025 = vsel %vm1022, %v1016, %v1017
      %v1026 = vsel %vm1022, %v1015, %v1016
      %v1027 = vsel %vm1022, %v1014, %v1015
      %v1028 = vsel %vm1022, %v1013, %v1014
      %v1029 = vsel %vm1022, %v1012, %v1013
      %v1030 = vsel %vm1022, %v1011, %v1012
      %v1031 = vsel %vm1022, %v1010, %v1011
      %v1032 = vsel %vm1022, %v1009, %v1010
      %v1033 = vsel %vm1022, %v1008, %v1009
      %v1034 = vsel %vm1022, %v1007, %v1008
      %v1035 = vsel %vm1022, %v1006, %v1007
      %v1036 = vsel %vm1022, %v1005, %v1006
      %v1037 = vsel %vm1022, %v1004, %v1005
      %v1038 = vsel %vm1022, %v1019, %v1004
      %v1039 = vrot.slane %v988, 2
      %v1040 = vrot.slane %v989, 2
      %v1041 = vrot.slane %v990, 2
      %v1042 = vrot.slane %v991, 2
      %v1043 = vrot.slane %v992, 2
      %v1044 = vrot.slane %v993, 2
      %v1045 = vrot.slane %v994, 2
      %v1046 = vrot.slane %v995, 2
      %v1047 = vrot.slane %v996, 2
      %v1048 = vrot.slane %v997, 2
      %v1049 = vrot.slane %v998, 2
      %v1050 = vrot.slane %v999, 2
      %v1051 = vrot.slane %v1000, 2
      %v1052 = vrot.slane %v1001, 2
      %v1053 = vrot.slane %v1002, 2
      %v1054 = vrot.slane %v1003, 2
      %vm1055 = vcmp.lt.s32.totalorder %v1021, 6
      %v1056 = vsel %vm1055, %v1053, %v1054
      %v1057 = vsel %vm1055, %v1052, %v1053
      %v1058 = vsel %vm1055, %v1051, %v1052
      %v1059 = vsel %vm1055, %v1050, %v1051
      %v1060 = vsel %vm1055, %v1049, %v1050
      %v1061 = vsel %vm1055, %v1048, %v1049
      %v1062 = vsel %vm1055, %v1047, %v1048
      %v1063 = vsel %vm1055, %v1046, %v1047
      %v1064 = vsel %vm1055, %v1045, %v1046
      %v1065 = vsel %vm1055, %v1044, %v1045
      %v1066 = vsel %vm1055, %v1043, %v1044
      %v1067 = vsel %vm1055, %v1042, %v1043
      %v1068 = vsel %vm1055, %v1041, %v1042
      %v1069 = vsel %vm1055, %v1040, %v1041
      %v1070 = vsel %vm1055, %v1039, %v1040
      %v1071 = vsel %vm1055, %v1054, %v1039
      %v1072 = vrot.slane %v988, 3
      %v1073 = vrot.slane %v989, 3
      %v1074 = vrot.slane %v990, 3
      %v1075 = vrot.slane %v991, 3
      %v1076 = vrot.slane %v992, 3
      %v1077 = vrot.slane %v993, 3
      %v1078 = vrot.slane %v994, 3
      %v1079 = vrot.slane %v995, 3
      %v1080 = vrot.slane %v996, 3
      %v1081 = vrot.slane %v997, 3
      %v1082 = vrot.slane %v998, 3
      %v1083 = vrot.slane %v999, 3
      %v1084 = vrot.slane %v1000, 3
      %v1085 = vrot.slane %v1001, 3
      %v1086 = vrot.slane %v1002, 3
      %v1087 = vrot.slane %v1003, 3
      %vm1088 = vcmp.lt.s32.totalorder %v1021, 5
      %v1089 = vsel %vm1088, %v1086, %v1087
      %v1090 = vsel %vm1088, %v1085, %v1086
      %v1091 = vsel %vm1088, %v1084, %v1085
      %v1092 = vsel %vm1088, %v1083, %v1084
      %v1093 = vsel %vm1088, %v1082, %v1083
      %v1094 = vsel %vm1088, %v1081, %v1082
      %v1095 = vsel %vm1088, %v1080, %v1081
      %v1096 = vsel %vm1088, %v1079, %v1080
      %v1097 = vsel %vm1088, %v1078, %v1079
      %v1098 = vsel %vm1088, %v1077, %v1078
      %v1099 = vsel %vm1088, %v1076, %v1077
      %v1100 = vsel %vm1088, %v1075, %v1076
      %v1101 = vsel %vm1088, %v1074, %v1075
      %v1102 = vsel %vm1088, %v1073, %v1074
      %v1103 = vsel %vm1088, %v1072, %v1073
      %v1104 = vsel %vm1088, %v1087, %v1072
      %1121 = vrot.lane.b32.xlu0 %v1037, 32
      %v1122 = vpop.permute.xlu0 %1121
      %1123 = vrot.lane.b32.xlu0 %v1036, 32
      %v1124 = vpop.permute.xlu0 %1123
      %1125 = vrot.lane.b32.xlu0 %v1035, 32
      %v1126 = vpop.permute.xlu0 %1125
      %1127 = vrot.lane.b32.xlu0 %v1034, 32
      %v1128 = vpop.permute.xlu0 %1127
      %1129 = vrot.lane.b32.xlu0 %v1033, 32
      %v1130 = vpop.permute.xlu0 %1129
      %1131 = vrot.lane.b32.xlu0 %v1032, 32
      %v1132 = vpop.permute.xlu0 %1131
      %1133 = vrot.lane.b32.xlu0 %v1031, 32
      %v1134 = vpop.permute.xlu0 %1133
      %1135 = vrot.lane.b32.xlu0 %v1030, 32
      %v1136 = vpop.permute.xlu0 %1135
      %1137 = vrot.lane.b32.xlu0 %v1029, 32
      %v1138 = vpop.permute.xlu0 %1137
      %1139 = vrot.lane.b32.xlu0 %v1028, 32
      %v1140 = vpop.permute.xlu0 %1139
      %1141 = vrot.lane.b32.xlu0 %v1027, 32
      %v1142 = vpop.permute.xlu0 %1141
      %1143 = vrot.lane.b32.xlu0 %v1026, 32
      %v1144 = vpop.permute.xlu0 %1143
      %1145 = vrot.lane.b32.xlu0 %v1025, 32
      %v1146 = vpop.permute.xlu0 %1145
      %1147 = vrot.lane.b32.xlu0 %v1024, 32
      %v1148 = vpop.permute.xlu0 %1147
      %1149 = vrot.lane.b32.xlu0 %v1023, 32
      %v1150 = vpop.permute.xlu0 %1149
      %1151 = vrot.lane.b32.xlu0 %v1038, 32
      %v1152 = vpop.permute.xlu0 %1151
      %1185 = vrot.lane.b32.xlu0 %v1070, 64
      %v1186 = vpop.permute.xlu0 %1185
      %1187 = vrot.lane.b32.xlu0 %v1069, 64
      %v1188 = vpop.permute.xlu0 %1187
      %1189 = vrot.lane.b32.xlu0 %v1068, 64
      %v1190 = vpop.permute.xlu0 %1189
      %1191 = vrot.lane.b32.xlu0 %v1067, 64
      %v1192 = vpop.permute.xlu0 %1191
      %1193 = vrot.lane.b32.xlu0 %v1066, 64
      %v1194 = vpop.permute.xlu0 %1193
      %1195 = vrot.lane.b32.xlu0 %v1065, 64
      %v1196 = vpop.permute.xlu0 %1195
      %1197 = vrot.lane.b32.xlu0 %v1064, 64
      %v1198 = vpop.permute.xlu0 %1197
      %1199 = vrot.lane.b32.xlu0 %v1063, 64
      %v1200 = vpop.permute.xlu0 %1199
      %1201 = vrot.lane.b32.xlu0 %v1062, 64
      %v1202 = vpop.permute.xlu0 %1201
      %1203 = vrot.lane.b32.xlu0 %v1061, 64
      %v1204 = vpop.permute.xlu0 %1203
      %1205 = vrot.lane.b32.xlu0 %v1060, 64
      %v1206 = vpop.permute.xlu0 %1205
      %1207 = vrot.lane.b32.xlu0 %v1059, 64
      %v1208 = vpop.permute.xlu0 %1207
      %1209 = vrot.lane.b32.xlu0 %v1058, 64
      %v1210 = vpop.permute.xlu0 %1209
      %1211 = vrot.lane.b32.xlu0 %v1057, 64
      %v1212 = vpop.permute.xlu0 %1211
      %1213 = vrot.lane.b32.xlu0 %v1056, 64
      %v1214 = vpop.permute.xlu0 %1213
      %1215 = vrot.lane.b32.xlu0 %v1071, 64
      %v1216 = vpop.permute.xlu0 %1215
      %1249 = vrot.lane.b32.xlu0 %v1103, 96
      %v1250 = vpop.permute.xlu0 %1249
      %1251 = vrot.lane.b32.xlu0 %v1102, 96
      %v1252 = vpop.permute.xlu0 %1251
      %1253 = vrot.lane.b32.xlu0 %v1101, 96
      %v1254 = vpop.permute.xlu0 %1253
      %1255 = vrot.lane.b32.xlu0 %v1100, 96
      %v1256 = vpop.permute.xlu0 %1255
      %1257 = vrot.lane.b32.xlu0 %v1099, 96
      %v1258 = vpop.permute.xlu0 %1257
      %1259 = vrot.lane.b32.xlu0 %v1098, 96
      %v1260 = vpop.permute.xlu0 %1259
      %1261 = vrot.lane.b32.xlu0 %v1097, 96
      %v1262 = vpop.permute.xlu0 %1261
      %1263 = vrot.lane.b32.xlu0 %v1096, 96
      %v1264 = vpop.permute.xlu0 %1263
      %1265 = vrot.lane.b32.xlu0 %v1095, 96
      %v1266 = vpop.permute.xlu0 %1265
      %1267 = vrot.lane.b32.xlu0 %v1094, 96
      %v1268 = vpop.permute.xlu0 %1267
      %1269 = vrot.lane.b32.xlu0 %v1093, 96
      %v1270 = vpop.permute.xlu0 %1269
      %1271 = vrot.lane.b32.xlu0 %v1092, 96
      %v1272 = vpop.permute.xlu0 %1271
      %1273 = vrot.lane.b32.xlu0 %v1091, 96
      %v1274 = vpop.permute.xlu0 %1273
      %1275 = vrot.lane.b32.xlu0 %v1090, 96
      %v1276 = vpop.permute.xlu0 %1275
      %1277 = vrot.lane.b32.xlu0 %v1089, 96
      %v1278 = vpop.permute.xlu0 %1277
      %1279 = vrot.lane.b32.xlu0 %v1104, 96
      %v1280 = vpop.permute.xlu0 %1279
      %v1297 = vsel %vm666, %v988, %v1122
      %v1298 = vsel %vm666, %v989, %v1124
      %v1299 = vsel %vm666, %v990, %v1126
      %v1300 = vsel %vm666, %v991, %v1128
      %v1301 = vsel %vm666, %v992, %v1130
      %v1302 = vsel %vm666, %v993, %v1132
      %v1303 = vsel %vm666, %v994, %v1134
      %v1304 = vsel %vm666, %v995, %v1136
      %v1305 = vsel %vm666, %v996, %v1138
      %v1306 = vsel %vm666, %v997, %v1140
      %v1307 = vsel %vm666, %v998, %v1142
      %v1308 = vsel %vm666, %v999, %v1144
      %v1309 = vsel %vm666, %v1000, %v1146
      %v1310 = vsel %vm666, %v1001, %v1148
      %v1311 = vsel %vm666, %v1002, %v1150
      %v1312 = vsel %vm666, %v1003, %v1152
      %v1313 = vsel %vm461, %v1297, %v1186
      %v1314 = vsel %vm461, %v1298, %v1188
      %v1315 = vsel %vm461, %v1299, %v1190
      %v1316 = vsel %vm461, %v1300, %v1192
      %v1317 = vsel %vm461, %v1301, %v1194
      %v1318 = vsel %vm461, %v1302, %v1196
      %v1319 = vsel %vm461, %v1303, %v1198
      %v1320 = vsel %vm461, %v1304, %v1200
      %v1321 = vsel %vm461, %v1305, %v1202
      %v1322 = vsel %vm461, %v1306, %v1204
      %v1323 = vsel %vm461, %v1307, %v1206
      %v1324 = vsel %vm461, %v1308, %v1208
      %v1325 = vsel %vm461, %v1309, %v1210
      %v1326 = vsel %vm461, %v1310, %v1212
      %v1327 = vsel %vm461, %v1311, %v1214
      %v1328 = vsel %vm461, %v1312, %v1216
      %vm1329 = vcmask 785408
      %v1330 = vsel %vm1329, %v1313, %v1250
      %v1331 = vsel %vm1329, %v1314, %v1252
      %v1332 = vsel %vm1329, %v1315, %v1254
      %v1333 = vsel %vm1329, %v1316, %v1256
      %v1334 = vsel %vm1329, %v1317, %v1258
      %v1335 = vsel %vm1329, %v1318, %v1260
      %v1336 = vsel %vm1329, %v1319, %v1262
      %v1337 = vsel %vm1329, %v1320, %v1264
      %v1338 = vsel %vm1329, %v1321, %v1266
      %v1339 = vsel %vm1329, %v1322, %v1268
      %v1340 = vsel %vm1329, %v1323, %v1270
      %v1341 = vsel %vm1329, %v1324, %v1272
      %v1342 = vsel %vm1329, %v1325, %v1274
      %v1343 = vsel %vm1329, %v1326, %v1276
      %v1344 = vsel %vm1329, %v1327, %v1278
      %v1345 = vsel %vm1329, %v1328, %v1280
      %v1346 = vld [vmem:[%s5] sm:$0xf]
      %v1347 = vld [vmem:[%s5 + $0x4] sm:$0xf]
      %v1348 = vld [vmem:[%s5 + $0x8] sm:$0xf]
      %v1349 = vld [vmem:[%s5 + $0xc] sm:$0xf]
      %v1350 = vld [vmem:[%s5 + $0x10] sm:$0xf]
      %v1351 = vld [vmem:[%s5 + $0x14] sm:$0xf]
      %v1352 = vld [vmem:[%s5 + $0x18] sm:$0xf]
      %v1353 = vld [vmem:[%s5 + $0x1c] sm:$0xf]
      %v1354 = vld [vmem:[%s5 + $0x20] sm:$0xf]
      %v1355 = vld [vmem:[%s5 + $0x24] sm:$0xf]
      %v1356 = vld [vmem:[%s5 + $0x28] sm:$0xf]
      %v1357 = vld [vmem:[%s5 + $0x2c] sm:$0xf]
      %v1358 = vld [vmem:[%s5 + $0x30] sm:$0xf]
      %v1359 = vld [vmem:[%s5 + $0x34] sm:$0xf]
      %v1360 = vld [vmem:[%s5 + $0x38] sm:$0xf]
      %v1361 = vld [vmem:[%s5 + $0x3c] sm:$0xf]
      %v1362 = vunpack.c.l.bf16 %v1346
      %v1363 = vunpack.c.l.bf16 %v1347
      %v1364 = vunpack.c.l.bf16 %v1348
      %v1365 = vunpack.c.l.bf16 %v1349
      %v1366 = vunpack.c.l.bf16 %v1350
      %v1367 = vunpack.c.l.bf16 %v1351
      %v1368 = vunpack.c.l.bf16 %v1352
      %v1369 = vunpack.c.l.bf16 %v1353
      %v1370 = vunpack.c.l.bf16 %v1354
      %v1371 = vunpack.c.l.bf16 %v1355
      %v1372 = vunpack.c.l.bf16 %v1356
      %v1373 = vunpack.c.l.bf16 %v1357
      %v1374 = vunpack.c.l.bf16 %v1358
      %v1375 = vunpack.c.l.bf16 %v1359
      %v1376 = vunpack.c.l.bf16 %v1360
      %v1377 = vunpack.c.l.bf16 %v1361
      %v1378 = vld [vmem:[%s6] sm:$0x1]
      %v1380 = vlaneseq
      %v1381 = vshrl.u32 %v1380, 7
      %v1382 = vsub.s32 0, %v1381
      %v1383 = vrot.slane %v1378, %v1382
      %1385 = vmatprep.subr.mxu0 0.0
      %1386 = vmatpush1.msra.mxu0 %v1362
      %1387 = vmatprep.subr.mxu0 0.0
      %1388 = vmatpush1.msra.mxu0 %v1363
      %1389 = vmatprep.subr.mxu0 0.0
      %1390 = vmatpush1.msra.mxu0 %v1364
      %1391 = vmatprep.subr.mxu0 0.0
      %1392 = vmatpush1.msra.mxu0 %v1365
      %1393 = vmatprep.subr.mxu0 0.0
      %1394 = vmatpush1.msra.mxu0 %v1366
      %1395 = vmatprep.subr.mxu0 0.0
      %1396 = vmatpush1.msra.mxu0 %v1367
      %1397 = vmatprep.subr.mxu0 0.0
      %1398 = vmatpush1.msra.mxu0 %v1368
      %1399 = vmatprep.subr.mxu0 0.0
      %1400 = vmatpush1.msra.mxu0 %v1369
      %1401 = vmatprep.subr.mxu0 0.0
      %1402 = vmatpush1.msra.mxu0 %v1370
      %1403 = vmatprep.subr.mxu0 0.0
      %1404 = vmatpush1.msra.mxu0 %v1371
      %1405 = vmatprep.subr.mxu0 0.0
      %1406 = vmatpush1.msra.mxu0 %v1372
      %1407 = vmatprep.subr.mxu0 0.0
      %1408 = vmatpush1.msra.mxu0 %v1373
      %1409 = vmatprep.subr.mxu0 0.0
      %1410 = vmatpush1.msra.mxu0 %v1374
      %1411 = vmatprep.subr.mxu0 0.0
      %1412 = vmatpush1.msra.mxu0 %v1375
      %1413 = vmatprep.subr.mxu0 0.0
      %1414 = vmatpush1.msra.mxu0 %v1376
      %1415 = vmatprep.subr.mxu0 0.0
      %1416 = vmatpush1.msra.mxu0 %v1377
      %1417 = vmatprep.subr.mxu0 0.0
      %1418 = vmatpush1.msra.mxu0 0.0
      %1419 = vmatprep.subr.mxu0 0.0
      %1420 = vmatpush1.msra.mxu0 0.0
      %1421 = vmatprep.subr.mxu0 0.0
      %1422 = vmatpush1.msra.mxu0 0.0
      %1423 = vmatprep.subr.mxu0 0.0
      %1424 = vmatpush1.msra.mxu0 0.0
      %1425 = vmatprep.subr.mxu0 0.0
      %1426 = vmatpush1.msra.mxu0 0.0
      %1427 = vmatprep.subr.mxu0 0.0
      %1428 = vmatpush1.msra.mxu0 0.0
      %1429 = vmatprep.subr.mxu0 0.0
      %1430 = vmatpush1.msra.mxu0 0.0
      %1431 = vmatprep.subr.mxu0 0.0
      %1432 = vmatpush1.msra.mxu0 0.0
      %1433 = vmatprep.subr.mxu0 0.0
      %1434 = vmatpush1.msra.mxu0 0.0
      %1435 = vmatprep.subr.mxu0 0.0
      %1436 = vmatpush1.msra.mxu0 0.0
      %1437 = vmatprep.subr.mxu0 0.0
      %1438 = vmatpush1.msra.mxu0 0.0
      %1439 = vmatprep.subr.mxu0 0.0
      %1440 = vmatpush1.msra.mxu0 0.0
      %1441 = vmatprep.subr.mxu0 0.0
      %1442 = vmatpush1.msra.mxu0 0.0
      %1443 = vmatprep.subr.mxu0 0.0
      %1444 = vmatpush1.msra.mxu0 0.0
      %1445 = vmatprep.subr.mxu0 0.0
      %1446 = vmatpush1.msra.mxu0 0.0
      %1447 = vmatprep.subr.mxu0 0.0
      %1448 = vmatpush1.msra.mxu0 0.0
      %1449 = vmatprep.mubr.f32.mxu0 0.0
      %1450 = vmatmul.mubr.f32.gmra.mrb[0].mxu0 %v1330
      %v1451 = vpop.f32.mrb[0].mxu0
      %v1452 = vadd.f32 %v1383, %v1451
      %v1453 = vpop.f32.mrb[0].mxu0
      %1454 = vmatprep.mubr.f32.mxu0 0.0
      %1455 = vmatmul.mubr.f32.gmra.mrb[0].mxu0 %v1331
      %v1456 = vpop.f32.mrb[0].mxu0
      %v1457 = vadd.f32 %v1383, %v1456
      %v1458 = vpop.f32.mrb[0].mxu0
      %1459 = vmatprep.mubr.f32.mxu0 0.0
      %1460 = vmatmul.mubr.f32.gmra.mrb[0].mxu0 %v1332
      %v1461 = vpop.f32.mrb[0].mxu0
      %v1462 = vadd.f32 %v1383, %v1461
      %v1463 = vpop.f32.mrb[0].mxu0
      %1464 = vmatprep.mubr.f32.mxu0 0.0
      %1465 = vmatmul.mubr.f32.gmra.mrb[0].mxu0 %v1333
      %v1466 = vpop.f32.mrb[0].mxu0
      %v1467 = vadd.f32 %v1383, %v1466
      %v1468 = vpop.f32.mrb[0].mxu0
      %1469 = vmatprep.mubr.f32.mxu0 0.0
      %1470 = vmatmul.mubr.f32.gmra.mrb[0].mxu0 %v1334
      %v1471 = vpop.f32.mrb[0].mxu0
      %v1472 = vadd.f32 %v1383, %v1471
      %v1473 = vpop.f32.mrb[0].mxu0
      %1474 = vmatprep.mubr.f32.mxu0 0.0
      %1475 = vmatmul.mubr.f32.gmra.mrb[0].mxu0 %v1335
      %v1476 = vpop.f32.mrb[0].mxu0
      %v1477 = vadd.f32 %v1383, %v1476
      %v1478 = vpop.f32.mrb[0].mxu0
      %1479 = vmatprep.mubr.f32.mxu0 0.0
      %1480 = vmatmul.mubr.f32.gmra.mrb[0].mxu0 %v1336
      %v1481 = vpop.f32.mrb[0].mxu0
      %v1482 = vadd.f32 %v1383, %v1481
      %v1483 = vpop.f32.mrb[0].mxu0
      %1484 = vmatprep.mubr.f32.mxu0 0.0
      %1485 = vmatmul.mubr.f32.gmra.mrb[0].mxu0 %v1337
      %v1486 = vpop.f32.mrb[0].mxu0
      %v1487 = vadd.f32 %v1383, %v1486
      %v1488 = vpop.f32.mrb[0].mxu0
      %1489 = vmatprep.mubr.f32.mxu0 0.0
      %1490 = vmatmul.mubr.f32.gmra.mrb[0].mxu0 %v1338
      %v1491 = vpop.f32.mrb[0].mxu0
      %v1492 = vadd.f32 %v1383, %v1491
      %v1493 = vpop.f32.mrb[0].mxu0
      %1494 = vmatprep.mubr.f32.mxu0 0.0
      %1495 = vmatmul.mubr.f32.gmra.mrb[0].mxu0 %v1339
      %v1496 = vpop.f32.mrb[0].mxu0
      %v1497 = vadd.f32 %v1383, %v1496
      %v1498 = vpop.f32.mrb[0].mxu0
      %1499 = vmatprep.mubr.f32.mxu0 0.0
      %1500 = vmatmul.mubr.f32.gmra.mrb[0].mxu0 %v1340
      %v1501 = vpop.f32.mrb[0].mxu0
      %v1502 = vadd.f32 %v1383, %v1501
      %v1503 = vpop.f32.mrb[0].mxu0
      %1504 = vmatprep.mubr.f32.mxu0 0.0
      %1505 = vmatmul.mubr.f32.gmra.mrb[0].mxu0 %v1341
      %v1506 = vpop.f32.mrb[0].mxu0
      %v1507 = vadd.f32 %v1383, %v1506
      %v1508 = vpop.f32.mrb[0].mxu0
      %1509 = vmatprep.mubr.f32.mxu0 0.0
      %1510 = vmatmul.mubr.f32.gmra.mrb[0].mxu0 %v1342
      %v1511 = vpop.f32.mrb[0].mxu0
      %v1512 = vadd.f32 %v1383, %v1511
      %v1513 = vpop.f32.mrb[0].mxu0
      %1514 = vmatprep.mubr.f32.mxu0 0.0
      %1515 = vmatmul.mubr.f32.gmra.mrb[0].mxu0 %v1343
      %v1516 = vpop.f32.mrb[0].mxu0
      %v1517 = vadd.f32 %v1383, %v1516
      %v1518 = vpop.f32.mrb[0].mxu0
      %1519 = vmatprep.mubr.f32.mxu0 0.0
      %1520 = vmatmul.mubr.f32.gmra.mrb[0].mxu0 %v1344
      %v1521 = vpop.f32.mrb[0].mxu0
      %v1522 = vadd.f32 %v1383, %v1521
      %v1523 = vpop.f32.mrb[0].mxu0
      %1524 = vmatprep.mubr.f32.mxu0 0.0
      %1525 = vmatmul.mubr.f32.gmra.mrb[0].mxu0 %v1345
      %v1526 = vpop.f32.mrb[0].mxu0
      %v1527 = vadd.f32 %v1383, %v1526
      %v1528 = vpop.f32.mrb[0].mxu0
      %1529 = vdwg.mxu0
      %v1530 = vmax.f32 %v1452, 0.0
      %v1531 = vmax.f32 %v1457, 0.0
      %v1532 = vmax.f32 %v1462, 0.0
      %v1533 = vmax.f32 %v1467, 0.0
      %v1534 = vmax.f32 %v1472, 0.0
      %v1535 = vmax.f32 %v1477, 0.0
      %v1536 = vmax.f32 %v1482, 0.0
      %v1537 = vmax.f32 %v1487, 0.0
      %v1538 = vmax.f32 %v1492, 0.0
      %v1539 = vmax.f32 %v1497, 0.0
      %v1540 = vmax.f32 %v1502, 0.0
      %v1541 = vmax.f32 %v1507, 0.0
      %v1542 = vmax.f32 %v1512, 0.0
      %v1543 = vmax.f32 %v1517, 0.0
      %v1544 = vmax.f32 %v1522, 0.0
      %v1545 = vmax.f32 %v1527, 0.0
      %v1546 = vadd.s32 %v1021, 8
      %v1547 = vadd.s32 %v1021, 16
      %v1548 = vadd.s32 %v1021, 24
      %v1549 = vadd.s32 %v1021, 32
      %v1550 = vadd.s32 %v1021, 40
      %v1551 = vadd.s32 %v1021, 48
      %v1552 = vadd.s32 %v1021, 56
      %v1553 = vadd.s32 %v1021, 64
      %v1554 = vadd.s32 %v1021, 72
      %v1555 = vadd.s32 %v1021, 80
      %v1556 = vadd.s32 %v1021, 88
      %v1557 = vadd.s32 %v1021, 96
      %v1558 = vadd.s32 %v1021, 104
      %v1559 = vadd.s32 %v1021, 112
      %v1560 = vadd.s32 %v1021, 120
      %vm1561 = vcmp.lt.s32.totalorder %v1021, 0
      %v1562 = vsub.s32 0, %v1021
      %v1563 = vsel %vm1561, %v1562, %v1021
      %v1564 = vshrl.u32 %v1563, 4
      %v1565 = vand.u32 %v1563, 15
      %v1566 = vsub.s32 0, %v1565
      %v1567 = vsel %vm1561, %v1566, %v1565
      %vm1568 = vcmp.lt.s32.totalorder %v1546, 0
      %v1569 = vsub.s32 0, %v1546
      %v1570 = vsel %vm1568, %v1569, %v1546
      %v1571 = vshrl.u32 %v1570, 4
      %v1572 = vand.u32 %v1570, 15
      %v1573 = vsub.s32 0, %v1572
      %v1574 = vsel %vm1568, %v1573, %v1572
      %vm1575 = vcmp.lt.s32.totalorder %v1547, 0
      %v1576 = vsub.s32 0, %v1547
      %v1577 = vsel %vm1575, %v1576, %v1547
      %v1578 = vshrl.u32 %v1577, 4
      %v1579 = vand.u32 %v1577, 15
      %v1580 = vsub.s32 0, %v1579
      %v1581 = vsel %vm1575, %v1580, %v1579
      %vm1582 = vcmp.lt.s32.totalorder %v1548, 0
      %v1583 = vsub.s32 0, %v1548
      %v1584 = vsel %vm1582, %v1583, %v1548
      %v1585 = vshrl.u32 %v1584, 4
      %v1586 = vand.u32 %v1584, 15
      %v1587 = vsub.s32 0, %v1586
      %v1588 = vsel %vm1582, %v1587, %v1586
      %vm1589 = vcmp.lt.s32.totalorder %v1549, 0
      %v1590 = vsub.s32 0, %v1549
      %v1591 = vsel %vm1589, %v1590, %v1549
      %v1592 = vshrl.u32 %v1591, 4
      %v1593 = vand.u32 %v1591, 15
      %v1594 = vsub.s32 0, %v1593
      %v1595 = vsel %vm1589, %v1594, %v1593
      %vm1596 = vcmp.lt.s32.totalorder %v1550, 0
      %v1597 = vsub.s32 0, %v1550
      %v1598 = vsel %vm1596, %v1597, %v1550
      %v1599 = vshrl.u32 %v1598, 4
      %v1600 = vand.u32 %v1598, 15
      %v1601 = vsub.s32 0, %v1600
      %v1602 = vsel %vm1596, %v1601, %v1600
      %vm1603 = vcmp.lt.s32.totalorder %v1551, 0
      %v1604 = vsub.s32 0, %v1551
      %v1605 = vsel %vm1603, %v1604, %v1551
      %v1606 = vshrl.u32 %v1605, 4
      %v1607 = vand.u32 %v1605, 15
      %v1608 = vsub.s32 0, %v1607
      %v1609 = vsel %vm1603, %v1608, %v1607
      %vm1610 = vcmp.lt.s32.totalorder %v1552, 0
      %v1611 = vsub.s32 0, %v1552
      %v1612 = vsel %vm1610, %v1611, %v1552
      %v1613 = vshrl.u32 %v1612, 4
      %v1614 = vand.u32 %v1612, 15
      %v1615 = vsub.s32 0, %v1614
      %v1616 = vsel %vm1610, %v1615, %v1614
      %vm1617 = vcmp.lt.s32.totalorder %v1553, 0
      %v1618 = vsub.s32 0, %v1553
      %v1619 = vsel %vm1617, %v1618, %v1553
      %v1620 = vshrl.u32 %v1619, 4
      %v1621 = vand.u32 %v1619, 15
      %v1622 = vsub.s32 0, %v1621
      %v1623 = vsel %vm1617, %v1622, %v1621
      %vm1624 = vcmp.lt.s32.totalorder %v1554, 0
      %v1625 = vsub.s32 0, %v1554
      %v1626 = vsel %vm1624, %v1625, %v1554
      %v1627 = vshrl.u32 %v1626, 4
      %v1628 = vand.u32 %v1626, 15
      %v1629 = vsub.s32 0, %v1628
      %v1630 = vsel %vm1624, %v1629, %v1628
      %vm1631 = vcmp.lt.s32.totalorder %v1555, 0
      %v1632 = vsub.s32 0, %v1555
      %v1633 = vsel %vm1631, %v1632, %v1555
      %v1634 = vshrl.u32 %v1633, 4
      %v1635 = vand.u32 %v1633, 15
      %v1636 = vsub.s32 0, %v1635
      %v1637 = vsel %vm1631, %v1636, %v1635
      %vm1638 = vcmp.lt.s32.totalorder %v1556, 0
      %v1639 = vsub.s32 0, %v1556
      %v1640 = vsel %vm1638, %v1639, %v1556
      %v1641 = vshrl.u32 %v1640, 4
      %v1642 = vand.u32 %v1640, 15
      %v1643 = vsub.s32 0, %v1642
      %v1644 = vsel %vm1638, %v1643, %v1642
      %vm1645 = vcmp.lt.s32.totalorder %v1557, 0
      %v1646 = vsub.s32 0, %v1557
      %v1647 = vsel %vm1645, %v1646, %v1557
      %v1648 = vshrl.u32 %v1647, 4
      %v1649 = vand.u32 %v1647, 15
      %v1650 = vsub.s32 0, %v1649
      %v1651 = vsel %vm1645, %v1650, %v1649
      %vm1652 = vcmp.lt.s32.totalorder %v1558, 0
      %v1653 = vsub.s32 0, %v1558
      %v1654 = vsel %vm1652, %v1653, %v1558
      %v1655 = vshrl.u32 %v1654, 4
      %v1656 = vand.u32 %v1654, 15
      %v1657 = vsub.s32 0, %v1656
      %v1658 = vsel %vm1652, %v1657, %v1656
      %vm1659 = vcmp.lt.s32.totalorder %v1559, 0
      %v1660 = vsub.s32 0, %v1559
      %v1661 = vsel %vm1659, %v1660, %v1559
      %v1662 = vshrl.u32 %v1661, 4
      %v1663 = vand.u32 %v1661, 15
      %v1664 = vsub.s32 0, %v1663
      %v1665 = vsel %vm1659, %v1664, %v1663
      %vm1666 = vcmp.lt.s32.totalorder %v1560, 0
      %v1667 = vsub.s32 0, %v1560
      %v1668 = vsel %vm1666, %v1667, %v1560
      %v1669 = vshrl.u32 %v1668, 4
      %v1670 = vand.u32 %v1668, 15
      %v1671 = vsub.s32 0, %v1670
      %v1672 = vsel %vm1666, %v1671, %v1670
      %vm1673 = vcmp.ne.s32.totalorder %v1567, 0
      %vm1674 = vcmp.ne.s32.totalorder %v1574, 0
      %vm1675 = vcmp.ne.s32.totalorder %v1581, 0
      %vm1676 = vcmp.ne.s32.totalorder %v1588, 0
      %vm1677 = vcmp.ne.s32.totalorder %v1595, 0
      %vm1678 = vcmp.ne.s32.totalorder %v1602, 0
      %vm1679 = vcmp.ne.s32.totalorder %v1609, 0
      %vm1680 = vcmp.ne.s32.totalorder %v1616, 0
      %vm1681 = vcmp.ne.s32.totalorder %v1623, 0
      %vm1682 = vcmp.ne.s32.totalorder %v1630, 0
      %vm1683 = vcmp.ne.s32.totalorder %v1637, 0
      %vm1684 = vcmp.ne.s32.totalorder %v1644, 0
      %vm1685 = vcmp.ne.s32.totalorder %v1651, 0
      %vm1686 = vcmp.ne.s32.totalorder %v1658, 0
      %vm1687 = vcmp.ne.s32.totalorder %v1665, 0
      %vm1688 = vcmp.ne.s32.totalorder %v1672, 0
      %vm1689 = vcmp.lt.s32.totalorder %v1567, 0
      %vm1690 = vcmp.lt.s32.totalorder %v1574, 0
      %vm1691 = vcmp.lt.s32.totalorder %v1581, 0
      %vm1692 = vcmp.lt.s32.totalorder %v1588, 0
      %vm1693 = vcmp.lt.s32.totalorder %v1595, 0
      %vm1694 = vcmp.lt.s32.totalorder %v1602, 0
      %vm1695 = vcmp.lt.s32.totalorder %v1609, 0
      %vm1696 = vcmp.lt.s32.totalorder %v1616, 0
      %vm1697 = vcmp.lt.s32.totalorder %v1623, 0
      %vm1698 = vcmp.lt.s32.totalorder %v1630, 0
      %vm1699 = vcmp.lt.s32.totalorder %v1637, 0
      %vm1700 = vcmp.lt.s32.totalorder %v1644, 0
      %vm1701 = vcmp.lt.s32.totalorder %v1651, 0
      %vm1702 = vcmp.lt.s32.totalorder %v1658, 0
      %vm1703 = vcmp.lt.s32.totalorder %v1665, 0
      %vm1704 = vcmp.lt.s32.totalorder %v1672, 0
      %vm1705 = vmand %vm1689, %vm1673
      %vm1706 = vmand %vm1690, %vm1674
      %vm1707 = vmand %vm1691, %vm1675
      %vm1708 = vmand %vm1692, %vm1676
      %vm1709 = vmand %vm1693, %vm1677
      %vm1710 = vmand %vm1694, %vm1678
      %vm1711 = vmand %vm1695, %vm1679
      %vm1712 = vmand %vm1696, %vm1680
      %vm1713 = vmand %vm1697, %vm1681
      %vm1714 = vmand %vm1698, %vm1682
      %vm1715 = vmand %vm1699, %vm1683
      %vm1716 = vmand %vm1700, %vm1684
      %vm1717 = vmand %vm1701, %vm1685
      %vm1718 = vmand %vm1702, %vm1686
      %vm1719 = vmand %vm1703, %vm1687
      %vm1720 = vmand %vm1704, %vm1688
      %v1721 = vadd.s32 %v1567, 16
      %v1722 = vadd.s32 %v1574, 16
      %v1723 = vadd.s32 %v1581, 16
      %v1724 = vadd.s32 %v1588, 16
      %v1725 = vadd.s32 %v1595, 16
      %v1726 = vadd.s32 %v1602, 16
      %v1727 = vadd.s32 %v1609, 16
      %v1728 = vadd.s32 %v1616, 16
      %v1729 = vadd.s32 %v1623, 16
      %v1730 = vadd.s32 %v1630, 16
      %v1731 = vadd.s32 %v1637, 16
      %v1732 = vadd.s32 %v1644, 16
      %v1733 = vadd.s32 %v1651, 16
      %v1734 = vadd.s32 %v1658, 16
      %v1735 = vadd.s32 %v1665, 16
      %v1736 = vadd.s32 %v1672, 16
      %v1737 = vsel %vm1705, %v1721, %v1567
      %v1738 = vsel %vm1706, %v1722, %v1574
      %v1739 = vsel %vm1707, %v1723, %v1581
      %v1740 = vsel %vm1708, %v1724, %v1588
      %v1741 = vsel %vm1709, %v1725, %v1595
      %v1742 = vsel %vm1710, %v1726, %v1602
      %v1743 = vsel %vm1711, %v1727, %v1609
      %v1744 = vsel %vm1712, %v1728, %v1616
      %v1745 = vsel %vm1713, %v1729, %v1623
      %v1746 = vsel %vm1714, %v1730, %v1630
      %v1747 = vsel %vm1715, %v1731, %v1637
      %v1748 = vsel %vm1716, %v1732, %v1644
      %v1749 = vsel %vm1717, %v1733, %v1651
      %v1750 = vsel %vm1718, %v1734, %v1658
      %v1751 = vsel %vm1719, %v1735, %v1665
      %v1752 = vsel %vm1720, %v1736, %v1672
      %vm1753 = vcmp.ge.s32.totalorder %v372, 0
      %vm1754 = vcmp.lt.s32.totalorder %v372, 8
      %vm1755 = vmand %vm1753, %vm1754
      %vm1756 = vcmp.lt.s32.totalorder %v1737, 15
      %vm1757 = vcmp.lt.s32.totalorder %v1738, 15
      %vm1758 = vcmp.lt.s32.totalorder %v1739, 15
      %vm1759 = vcmp.lt.s32.totalorder %v1740, 15
      %vm1760 = vcmp.lt.s32.totalorder %v1741, 15
      %vm1761 = vcmp.lt.s32.totalorder %v1742, 15
      %vm1762 = vcmp.lt.s32.totalorder %v1743, 15
      %vm1763 = vcmp.lt.s32.totalorder %v1744, 15
      %vm1764 = vcmp.lt.s32.totalorder %v1745, 15
      %vm1765 = vcmp.lt.s32.totalorder %v1746, 15
      %vm1766 = vcmp.lt.s32.totalorder %v1747, 15
      %vm1767 = vcmp.lt.s32.totalorder %v1748, 15
      %vm1768 = vcmp.lt.s32.totalorder %v1749, 15
      %vm1769 = vcmp.lt.s32.totalorder %v1750, 15
      %vm1770 = vcmp.lt.s32.totalorder %v1751, 15
      %vm1771 = vcmp.lt.s32.totalorder %v1752, 15
      %vm1772 = vmand %vm1755, %vm1756
      %vm1773 = vmand %vm1755, %vm1757
      %vm1774 = vmand %vm1755, %vm1758
      %vm1775 = vmand %vm1755, %vm1759
      %vm1776 = vmand %vm1755, %vm1760
      %vm1777 = vmand %vm1755, %vm1761
      %vm1778 = vmand %vm1755, %vm1762
      %vm1779 = vmand %vm1755, %vm1763
      %vm1780 = vmand %vm1755, %vm1764
      %vm1781 = vmand %vm1755, %vm1765
      %vm1782 = vmand %vm1755, %vm1766
      %vm1783 = vmand %vm1755, %vm1767
      %vm1784 = vmand %vm1755, %vm1768
      %vm1785 = vmand %vm1755, %vm1769
      %vm1786 = vmand %vm1755, %vm1770
      %vm1787 = vmand %vm1755, %vm1771
      %vm1788 = vcmp.ge.s32.totalorder %v372, 8
      %vm1789 = vcmp.lt.s32.totalorder %v372, 16
      %vm1790 = vmand %vm1788, %vm1789
      %vm1791 = vcmp.lt.s32.totalorder %v1737, 14
      %vm1792 = vcmp.lt.s32.totalorder %v1738, 14
      %vm1793 = vcmp.lt.s32.totalorder %v1739, 14
      %vm1794 = vcmp.lt.s32.totalorder %v1740, 14
      %vm1795 = vcmp.lt.s32.totalorder %v1741, 14
      %vm1796 = vcmp.lt.s32.totalorder %v1742, 14
      %vm1797 = vcmp.lt.s32.totalorder %v1743, 14
      %vm1798 = vcmp.lt.s32.totalorder %v1744, 14
      %vm1799 = vcmp.lt.s32.totalorder %v1745, 14
      %vm1800 = vcmp.lt.s32.totalorder %v1746, 14
      %vm1801 = vcmp.lt.s32.totalorder %v1747, 14
      %vm1802 = vcmp.lt.s32.totalorder %v1748, 14
      %vm1803 = vcmp.lt.s32.totalorder %v1749, 14
      %vm1804 = vcmp.lt.s32.totalorder %v1750, 14
      %vm1805 = vcmp.lt.s32.totalorder %v1751, 14
      %vm1806 = vcmp.lt.s32.totalorder %v1752, 14
      %vm1807 = vmand %vm1790, %vm1791
      %vm1808 = vmand %vm1790, %vm1792
      %vm1809 = vmand %vm1790, %vm1793
      %vm1810 = vmand %vm1790, %vm1794
      %vm1811 = vmand %vm1790, %vm1795
      %vm1812 = vmand %vm1790, %vm1796
      %vm1813 = vmand %vm1790, %vm1797
      %vm1814 = vmand %vm1790, %vm1798
      %vm1815 = vmand %vm1790, %vm1799
      %vm1816 = vmand %vm1790, %vm1800
      %vm1817 = vmand %vm1790, %vm1801
      %vm1818 = vmand %vm1790, %vm1802
      %vm1819 = vmand %vm1790, %vm1803
      %vm1820 = vmand %vm1790, %vm1804
      %vm1821 = vmand %vm1790, %vm1805
      %vm1822 = vmand %vm1790, %vm1806
      %vm1823 = vmor %vm1772, %vm1807
      %vm1824 = vmor %vm1773, %vm1808
      %vm1825 = vmor %vm1774, %vm1809
      %vm1826 = vmor %vm1775, %vm1810
      %vm1827 = vmor %vm1776, %vm1811
      %vm1828 = vmor %vm1777, %vm1812
      %vm1829 = vmor %vm1778, %vm1813
      %vm1830 = vmor %vm1779, %vm1814
      %vm1831 = vmor %vm1780, %vm1815
      %vm1832 = vmor %vm1781, %vm1816
      %vm1833 = vmor %vm1782, %vm1817
      %vm1834 = vmor %vm1783, %vm1818
      %vm1835 = vmor %vm1784, %vm1819
      %vm1836 = vmor %vm1785, %vm1820
      %vm1837 = vmor %vm1786, %vm1821
      %vm1838 = vmor %vm1787, %vm1822
      %vm1839 = vcmp.ge.s32.totalorder %v372, 16
      %vm1840 = vcmp.lt.s32.totalorder %v372, 24
      %vm1841 = vmand %vm1839, %vm1840
      %vm1842 = vcmp.lt.s32.totalorder %v1737, 13
      %vm1843 = vcmp.lt.s32.totalorder %v1738, 13
      %vm1844 = vcmp.lt.s32.totalorder %v1739, 13
      %vm1845 = vcmp.lt.s32.totalorder %v1740, 13
      %vm1846 = vcmp.lt.s32.totalorder %v1741, 13
      %vm1847 = vcmp.lt.s32.totalorder %v1742, 13
      %vm1848 = vcmp.lt.s32.totalorder %v1743, 13
      %vm1849 = vcmp.lt.s32.totalorder %v1744, 13
      %vm1850 = vcmp.lt.s32.totalorder %v1745, 13
      %vm1851 = vcmp.lt.s32.totalorder %v1746, 13
      %vm1852 = vcmp.lt.s32.totalorder %v1747, 13
      %vm1853 = vcmp.lt.s32.totalorder %v1748, 13
      %vm1854 = vcmp.lt.s32.totalorder %v1749, 13
      %vm1855 = vcmp.lt.s32.totalorder %v1750, 13
      %vm1856 = vcmp.lt.s32.totalorder %v1751, 13
      %vm1857 = vcmp.lt.s32.totalorder %v1752, 13
      %vm1858 = vmand %vm1841, %vm1842
      %vm1859 = vmand %vm1841, %vm1843
      %vm1860 = vmand %vm1841, %vm1844
      %vm1861 = vmand %vm1841, %vm1845
      %vm1862 = vmand %vm1841, %vm1846
      %vm1863 = vmand %vm1841, %vm1847
      %vm1864 = vmand %vm1841, %vm1848
      %vm1865 = vmand %vm1841, %vm1849
      %vm1866 = vmand %vm1841, %vm1850
      %vm1867 = vmand %vm1841, %vm1851
      %vm1868 = vmand %vm1841, %vm1852
      %vm1869 = vmand %vm1841, %vm1853
      %vm1870 = vmand %vm1841, %vm1854
      %vm1871 = vmand %vm1841, %vm1855
      %vm1872 = vmand %vm1841, %vm1856
      %vm1873 = vmand %vm1841, %vm1857
      %vm1874 = vmor %vm1823, %vm1858
      %vm1875 = vmor %vm1824, %vm1859
      %vm1876 = vmor %vm1825, %vm1860
      %vm1877 = vmor %vm1826, %vm1861
      %vm1878 = vmor %vm1827, %vm1862
      %vm1879 = vmor %vm1828, %vm1863
      %vm1880 = vmor %vm1829, %vm1864
      %vm1881 = vmor %vm1830, %vm1865
      %vm1882 = vmor %vm1831, %vm1866
      %vm1883 = vmor %vm1832, %vm1867
      %vm1884 = vmor %vm1833, %vm1868
      %vm1885 = vmor %vm1834, %vm1869
      %vm1886 = vmor %vm1835, %vm1870
      %vm1887 = vmor %vm1836, %vm1871
      %vm1888 = vmor %vm1837, %vm1872
      %vm1889 = vmor %vm1838, %vm1873
      %v1890 = vsel %vm1874, %v1530, 0.0
      %v1891 = vsel %vm1875, %v1531, 0.0
      %v1892 = vsel %vm1876, %v1532, 0.0
      %v1893 = vsel %vm1877, %v1533, 0.0
      %v1894 = vsel %vm1878, %v1534, 0.0
      %v1895 = vsel %vm1879, %v1535, 0.0
      %v1896 = vsel %vm1880, %v1536, 0.0
      %v1897 = vsel %vm1881, %v1537, 0.0
      %v1898 = vsel %vm1882, %v1538, 0.0
      %v1899 = vsel %vm1883, %v1539, 0.0
      %v1900 = vsel %vm1884, %v1540, 0.0
      %v1901 = vsel %vm1885, %v1541, 0.0
      %v1902 = vsel %vm1886, %v1542, 0.0
      %v1903 = vsel %vm1887, %v1543, 0.0
      %v1904 = vsel %vm1888, %v1544, 0.0
      %v1905 = vsel %vm1889, %v1545, 0.0
      %v1906 = vmax.f32 %v1890, %v1891
      %v1907 = vrot.slane %v1906, 4
      %v1908 = vmax.f32 %v1906, %v1907
      %v1909 = vrot.slane %v1908, 2
      %v1910 = vmax.f32 %v1908, %v1909
      %v1911 = vrot.slane %v1910, 1
      %v1912 = vmax.f32 %v1910, %v1911
      %v1913 = vmax.f32 %v1892, %v1893
      %v1914 = vrot.slane %v1913, 4
      %v1915 = vmax.f32 %v1913, %v1914
      %v1916 = vrot.slane %v1915, 2
      %v1917 = vmax.f32 %v1915, %v1916
      %v1918 = vrot.slane %v1917, 1
      %v1919 = vmax.f32 %v1917, %v1918
      %v1920 = vmax.f32 %v1894, %v1895
      %v1921 = vrot.slane %v1920, 4
      %v1922 = vmax.f32 %v1920, %v1921
      %v1923 = vrot.slane %v1922, 2
      %v1924 = vmax.f32 %v1922, %v1923
      %v1925 = vrot.slane %v1924, 1
      %v1926 = vmax.f32 %v1924, %v1925
      %v1927 = vmax.f32 %v1896, %v1897
      %v1928 = vrot.slane %v1927, 4
      %v1929 = vmax.f32 %v1927, %v1928
      %v1930 = vrot.slane %v1929, 2
      %v1931 = vmax.f32 %v1929, %v1930
      %v1932 = vrot.slane %v1931, 1
      %v1933 = vmax.f32 %v1931, %v1932
      %v1934 = vmax.f32 %v1898, %v1899
      %v1935 = vrot.slane %v1934, 4
      %v1936 = vmax.f32 %v1934, %v1935
      %v1937 = vrot.slane %v1936, 2
      %v1938 = vmax.f32 %v1936, %v1937
      %v1939 = vrot.slane %v1938, 1
      %v1940 = vmax.f32 %v1938, %v1939
      %v1941 = vmax.f32 %v1900, %v1901
      %v1942 = vrot.slane %v1941, 4
      %v1943 = vmax.f32 %v1941, %v1942
      %v1944 = vrot.slane %v1943, 2
      %v1945 = vmax.f32 %v1943, %v1944
      %v1946 = vrot.slane %v1945, 1
      %v1947 = vmax.f32 %v1945, %v1946
      %v1948 = vmax.f32 %v1902, %v1903
      %v1949 = vrot.slane %v1948, 4
      %v1950 = vmax.f32 %v1948, %v1949
      %v1951 = vrot.slane %v1950, 2
      %v1952 = vmax.f32 %v1950, %v1951
      %v1953 = vrot.slane %v1952, 1
      %v1954 = vmax.f32 %v1952, %v1953
      %v1955 = vmax.f32 %v1904, %v1905
      %v1956 = vrot.slane %v1955, 4
      %v1957 = vmax.f32 %v1955, %v1956
      %v1958 = vrot.slane %v1957, 2
      %v1959 = vmax.f32 %v1957, %v1958
      %v1960 = vrot.slane %v1959, 1
      %v1961 = vmax.f32 %v1959, %v1960
      %v1962 = vld [vmem:[%s7] sm:$0xf]
      %v1963 = vld [vmem:[%s7 + $0x4] sm:$0xf]
      %v1964 = vld [vmem:[%s7 + $0x8] sm:$0xf]
      %v1965 = vld [vmem:[%s7 + $0xc] sm:$0xf]
      %v1966 = vld [vmem:[%s7 + $0x10] sm:$0xf]
      %v1967 = vld [vmem:[%s7 + $0x14] sm:$0xf]
      %v1968 = vld [vmem:[%s7 + $0x18] sm:$0xf]
      %v1969 = vld [vmem:[%s7 + $0x1c] sm:$0xf]
      %v1970 = vld [vmem:[%s7 + $0x20] sm:$0xf]
      %v1971 = vld [vmem:[%s7 + $0x24] sm:$0xf]
      %v1972 = vld [vmem:[%s7 + $0x28] sm:$0xf]
      %v1973 = vld [vmem:[%s7 + $0x2c] sm:$0xf]
      %v1974 = vld [vmem:[%s7 + $0x30] sm:$0xf]
      %v1975 = vld [vmem:[%s7 + $0x34] sm:$0xf]
      %v1976 = vld [vmem:[%s7 + $0x38] sm:$0xf]
      %v1977 = vld [vmem:[%s7 + $0x3c] sm:$0xf]
      %v1978 = vunpack.c.l.bf16 %v1962
      %v1979 = vunpack.c.l.bf16 %v1963
      %v1980 = vunpack.c.l.bf16 %v1964
      %v1981 = vunpack.c.l.bf16 %v1965
      %v1982 = vunpack.c.l.bf16 %v1966
      %v1983 = vunpack.c.l.bf16 %v1967
      %v1984 = vunpack.c.l.bf16 %v1968
      %v1985 = vunpack.c.l.bf16 %v1969
      %v1986 = vunpack.c.l.bf16 %v1970
      %v1987 = vunpack.c.l.bf16 %v1971
      %v1988 = vunpack.c.l.bf16 %v1972
      %v1989 = vunpack.c.l.bf16 %v1973
      %v1990 = vunpack.c.l.bf16 %v1974
      %v1991 = vunpack.c.l.bf16 %v1975
      %v1992 = vunpack.c.l.bf16 %v1976
      %v1993 = vunpack.c.l.bf16 %v1977
      %v1994 = vld [vmem:[%s8] sm:$0x1]
      %v1996 = vlaneseq
      %v1997 = vshrl.u32 %v1996, 7
      %v1998 = vsub.s32 0, %v1997
      %v1999 = vrot.slane %v1994, %v1998
      %vm2009 = vcmask 1041409
      %v2010 = vsel %vm2009, %v1919, %v1912
      %vm2011 = vcmask 1042434
      %v2012 = vsel %vm2011, %v1926, %v2010
      %vm2013 = vcmask 1043459
      %v2014 = vsel %vm2013, %v1933, %v2012
      %vm2015 = vcmask 1044484
      %v2016 = vsel %vm2015, %v1940, %v2014
      %vm2017 = vcmask 1045509
      %v2018 = vsel %vm2017, %v1947, %v2016
      %vm2019 = vcmask 1046534
      %v2020 = vsel %vm2019, %v1954, %v2018
      %vm2021 = vcmask 1047559
      %v2022 = vsel %vm2021, %v1961, %v2020
      %2024 = vmatprep.subr.mxu0 0.0
      %2025 = vmatpush1.msra.mxu0 %v1978
      %2026 = vmatprep.subr.mxu0 0.0
      %2027 = vmatpush1.msra.mxu0 %v1979
      %2028 = vmatprep.subr.mxu0 0.0
      %2029 = vmatpush1.msra.mxu0 %v1980
      %2030 = vmatprep.subr.mxu0 0.0
      %2031 = vmatpush1.msra.mxu0 %v1981
      %2032 = vmatprep.subr.mxu0 0.0
      %2033 = vmatpush1.msra.mxu0 %v1982
      %2034 = vmatprep.subr.mxu0 0.0
      %2035 = vmatpush1.msra.mxu0 %v1983
      %2036 = vmatprep.subr.mxu0 0.0
      %2037 = vmatpush1.msra.mxu0 %v1984
      %2038 = vmatprep.subr.mxu0 0.0
      %2039 = vmatpush1.msra.mxu0 %v1985
      %2040 = vmatprep.subr.mxu0 0.0
      %2041 = vmatpush1.msra.mxu0 %v1986
      %2042 = vmatprep.subr.mxu0 0.0
      %2043 = vmatpush1.msra.mxu0 %v1987
      %2044 = vmatprep.subr.mxu0 0.0
      %2045 = vmatpush1.msra.mxu0 %v1988
      %2046 = vmatprep.subr.mxu0 0.0
      %2047 = vmatpush1.msra.mxu0 %v1989
      %2048 = vmatprep.subr.mxu0 0.0
      %2049 = vmatpush1.msra.mxu0 %v1990
      %2050 = vmatprep.subr.mxu0 0.0
      %2051 = vmatpush1.msra.mxu0 %v1991
      %2052 = vmatprep.subr.mxu0 0.0
      %2053 = vmatpush1.msra.mxu0 %v1992
      %2054 = vmatprep.subr.mxu0 0.0
      %2055 = vmatpush1.msra.mxu0 %v1993
      %2056 = vmatprep.subr.mxu0 0.0
      %2057 = vmatpush1.msra.mxu0 0.0
      %2058 = vmatprep.subr.mxu0 0.0
      %2059 = vmatpush1.msra.mxu0 0.0
      %2060 = vmatprep.subr.mxu0 0.0
      %2061 = vmatpush1.msra.mxu0 0.0
      %2062 = vmatprep.subr.mxu0 0.0
      %2063 = vmatpush1.msra.mxu0 0.0
      %2064 = vmatprep.subr.mxu0 0.0
      %2065 = vmatpush1.msra.mxu0 0.0
      %2066 = vmatprep.subr.mxu0 0.0
      %2067 = vmatpush1.msra.mxu0 0.0
      %2068 = vmatprep.subr.mxu0 0.0
      %2069 = vmatpush1.msra.mxu0 0.0
      %2070 = vmatprep.subr.mxu0 0.0
      %2071 = vmatpush1.msra.mxu0 0.0
      %2072 = vmatprep.subr.mxu0 0.0
      %2073 = vmatpush1.msra.mxu0 0.0
      %2074 = vmatprep.subr.mxu0 0.0
      %2075 = vmatpush1.msra.mxu0 0.0
      %2076 = vmatprep.subr.mxu0 0.0
      %2077 = vmatpush1.msra.mxu0 0.0
      %2078 = vmatprep.subr.mxu0 0.0
      %2079 = vmatpush1.msra.mxu0 0.0
      %2080 = vmatprep.subr.mxu0 0.0
      %2081 = vmatpush1.msra.mxu0 0.0
      %2082 = vmatprep.subr.mxu0 0.0
      %2083 = vmatpush1.msra.mxu0 0.0
      %2084 = vmatprep.subr.mxu0 0.0
      %2085 = vmatpush1.msra.mxu0 0.0
      %2086 = vmatprep.subr.mxu0 0.0
      %2087 = vmatpush1.msra.mxu0 0.0
      %2088 = vmatprep.mubr.f32.mxu0 0.0
      %2089 = vmatmul.mubr.f32.gmra.mrb[0].mxu0 %v2022
      %v2090 = vpop.f32.mrb[0].mxu0
      %v2091 = vadd.f32 %v1999, %v2090
      %v2092 = vpop.f32.mrb[0].mxu0
      %2093 = vdwg.mxu0
      %2094 = vst [vmem:[%s354] sm:$0xff] %v2091
      %p2095 = scmp.lt.s32.totalorder %s20, 1
      %s2096 = scalar_select %p2095, %s20, 1
      %s2097 = smul.addr %s2096, 8
      %s2098 = scalar_lea.vmem %s9, %s2097
      // Predicated region
      $region57: #{bert_cnn_forward.1} parent=55 // pred_check
        %p2099 = pneg %p237
      $region58: #{bert_cnn_forward.1} parent=55 // pred_check_branch
        %2101 = sbr.rel (%p2099) target = $region60
      $region59: #{bert_cnn_forward.1} parent=55 // pred_region
        _
      $region60: #{bert_cnn_forward.1} parent=55 // pred_fallthru
        _
    $region56: #{bert_cnn_forward.1} parent=5 // pred_fallthru
      _
    %p2102 = scmp.le.s32.totalorder 2, %s15
    // Predicated region
    $region61: #{bert_cnn_forward.1} parent=5 // pred_check
      %p2103 = pneg %p2102
    $region62: #{bert_cnn_forward.1} parent=5 // pred_check_branch
      %2105 = sbr.rel (%p2103) target = $region64
    $region63: #{bert_cnn_forward.1} parent=5 // pred_region
      %s2106 = ssub.s32 %s15, 2
      // Predicated region
      $region65: #{bert_cnn_forward.1} parent=63 // pred_check
        %p2107 = pneg %p243
      $region66: #{bert_cnn_forward.1} parent=63 // pred_check_branch
        %2109 = sbr.rel (%p2107) target = $region68
      $region67: #{bert_cnn_forward.1} parent=63 // pred_region
        %p2110 = scmp.lt.s32.totalorder %s21, 1
        %s2111 = scalar_select %p2110, %s21, 1
        %s2112 = smul.addr %s2111, 8
        %s2113 = scalar_lea.vmem %s9, %s2112
      $region68: #{bert_cnn_forward.1} parent=63 // pred_fallthru
        _
    $region64: #{bert_cnn_forward.1} parent=5 // pred_fallthru
      _
  $region6: #{bert_cnn_forward.1} parent=0 // loop_footer
    %s19 = sadd.s32 1, %s15
  $region7: #{bert_cnn_forward.1} parent=0 // loop_footer_branch
    %14 = sbr.rel target = $region3
  $region8: #{bert_cnn_forward.1} parent=0 // loop_exit
    _

</llo_original>
